<compile_context>
chip_gen: v7x
topology: tpu7x:2x2x1
jax: 0.10.0
libtpu: 0.0.40
codegen_flags: <defaults>
</compile_context>

<pallas_src>
import functools

import jax
import jax.numpy as jnp
from jax.experimental import pallas as pl
from jax.experimental.pallas import tpu as pltpu


def _round_up(x, m):
    return (x + m - 1) // m * m


# --------------------------------------------------------------- the kernel --

def _rwkp_kernel(x_ref, a_ref, wf_ref, bf_ref, wa_ref, ba_ref, o_ref,
                 acc_ref, y0_ref, ybuf_ref, *, max_step, tile, n_pad):
    s = pl.program_id(0)            # propagation step (sequential dependence)
    i = pl.program_id(1)            # output row block
    k = pl.program_id(2)            # reduction over adjacency column blocks
    n_k = pl.num_programs(2)

    # ---- seed sweep: at (s==0, i==0) compute y0 for column block k just
    #      before it is consumed by the first A @ y below.
    @pl.when(jnp.logical_and(s == 0, i == 0))
    def _():
        y0_blk = jax.nn.sigmoid(
            jnp.dot(x_ref[...], wf_ref[...],
                    preferred_element_type=jnp.float32) + bf_ref[...])
        off = pl.multiple_of(k * tile, tile)
        y0_ref[pl.ds(off, tile), :] = y0_blk.astype(y0_ref.dtype)
        ybuf_ref[pl.ds(off, tile), :] = y0_blk.astype(ybuf_ref.dtype)

    # ---- reduction over adjacency column blocks: acc (+)= A[i, k] @ y_prev[k]
    parity = s % 2                                        # ping-pong y buffers
    rd = pl.multiple_of(parity * n_pad + k * tile, tile)
    prod = jnp.dot(a_ref[...], ybuf_ref[pl.ds(rd, tile), :],
                   preferred_element_type=jnp.float32)

    @pl.when(k == 0)
    def _():
        acc_ref[...] = prod          # direct write: no zero-init store + load

    @pl.when(k != 0)
    def _():
        acc_ref[...] += prod

    # ---- epilogue for row block i: Wa linear + y0 gating, write next-step y.
    @pl.when(k == n_k - 1)
    def _():
        y = jnp.dot(acc_ref[...].astype(wa_ref.dtype), wa_ref[...],
                    preferred_element_type=jnp.float32) + ba_ref[...]
        y0_blk = y0_ref[pl.ds(pl.multiple_of(i * tile, tile), tile), :]
        y = y0_blk * y                                    # bf16 * f32 -> f32
        # reference applies the gate a second time on all but the last step
        y = jnp.where(s == max_step - 1, y, y0_blk * y)
        wr = pl.multiple_of((1 - parity) * n_pad + i * tile, tile)
        ybuf_ref[pl.ds(wr, tile), :] = y.astype(ybuf_ref.dtype)
        # written every step; final step's write (sequential s) is the result
        o_ref[...] = y.astype(o_ref.dtype)


# ----------------------------------------------------------- graph utilities --

def build_normalized_adj_padded(edge_index, num_nodes, n_pad, edge_weight=None,
                                direction="sym", self_loops=False,
                                dtype=jnp.bfloat16):
    """Dense JAX replica of the reference `normalize_adj`, built directly into
    a single zero-padded (n_pad, n_pad) buffer and cast once to the kernel
    dtype (no second O(N^2) pad/copy pass)."""
    row, col = edge_index[0], edge_index[1]
    if edge_weight is None:
        edge_weight = jnp.ones(edge_index.shape[1], jnp.float32)
    if self_loops:  # unused by RWKPConv.forward (self_loops=False)
        loop = jnp.arange(num_nodes, dtype=edge_index.dtype)
        row = jnp.concatenate([row, loop])
        col = jnp.concatenate([col, loop])
        edge_weight = jnp.concatenate(
            [edge_weight, jnp.ones(num_nodes, jnp.float32)])
    deg = jnp.zeros((num_nodes,), jnp.float32).at[col].add(edge_weight)
    if direction == "sym":
        d = jnp.where(deg > 0, deg ** -0.5, 0.0)      # masked_fill(inf -> 0)
        w = d[row] * edge_weight * d[col]
    elif direction == "row":
        d = jnp.where(deg > 0, 1.0 / deg, 0.0)
        w = d[row] * edge_weight
    elif direction == "col":
        d = jnp.where(deg > 0, 1.0 / deg, 0.0)
        w = edge_weight * d[col]
    elif direction == "no":
        w = edge_weight
    else:
        raise ValueError(direction)
    adj = jnp.zeros((n_pad, n_pad), jnp.float32).at[row, col].add(w)
    return adj.astype(dtype)


# ------------------------------------------------------------- pallas driver --

def rwkp_conv_forward(params, x, edge_index, edge_attr=None, *,
                      max_step=2, tile=512, adj_dtype=jnp.bfloat16):
    """Mirrors RWKPConv.forward(x, edge_index, edge_attr)."""
    del edge_attr  # unused by the reference RWKPConv.forward
    assert max_step >= 1
    assert tile % 128 == 0
    n, f = x.shape
    h = params["w_feat"].shape[1]
    tile = min(tile, _round_up(n, 128))
    n_pad = _round_up(n, tile)
    f_pad = _round_up(f, 128)
    h_pad = _round_up(h, 128)

    # zero padding: padded rows/cols of adj are zero, padded weight rows/cols
    # are zero, so real output entries are unaffected; we slice at the end.
    a_p = build_normalized_adj_padded(edge_index, n, n_pad,
                                      direction="sym", self_loops=False,
                                      dtype=adj_dtype)
    x_p = jnp.zeros((n_pad, f_pad), jnp.bfloat16).at[:n, :f].set(
        x.astype(jnp.bfloat16))
    wf_p = jnp.zeros((f_pad, h_pad), jnp.bfloat16).at[:f, :h].set(
        params["w_feat"].astype(jnp.bfloat16))
    bf_p = jnp.zeros((1, h_pad), jnp.float32).at[0, :h].set(params["b_feat"])
    wa_p = jnp.zeros((h_pad, h_pad), jnp.bfloat16).at[:h, :h].set(
        params["w_adj"].astype(jnp.bfloat16))
    ba_p = jnp.zeros((1, h_pad), jnp.float32).at[0, :h].set(params["b_adj"])

    n_blk = n_pad // tile
    grid = (max_step, n_blk, n_blk)
    pin = n_blk - 1   # x block index when outside the seed sweep (last seeded)

    adj_bytes = jnp.dtype(adj_dtype).itemsize
    vmem_est = (
        tile * h_pad * 4                       # f32 accumulator
        + n_pad * h_pad * 2                    # y0 gate (bf16)
        + 2 * n_pad * h_pad * 2                # y ping-pong (bf16)
        + 2 * tile * f_pad * 2                 # x block, double-buffered
        + 2 * tile * tile * adj_bytes          # A tile, double-buffered
        + 2 * f_pad * h_pad * 2                # Wf
        + 2 * h_pad * h_pad * 2                # Wa
        + 4 * 8 * h_pad * 4                    # biases (sublane-padded)
        + 2 * tile * h_pad * 4                 # output block, double-buffered
    )
    vmem_limit = int(min(max(1.3 * vmem_est, 32 * 1024 * 1024),
                         100 * 1024 * 1024))

    out = pl.pallas_call(
        functools.partial(_rwkp_kernel, max_step=max_step, tile=tile,
                          n_pad=n_pad),
        out_shape=jax.ShapeDtypeStruct((n_pad, h_pad), jnp.float32),
        grid_spec=pltpu.PrefetchScalarGridSpec(
            num_scalar_prefetch=0,
            grid=grid,
            in_specs=[
                # x row block: advances only during the seed sweep
                # (s==0, i==0); otherwise pinned to the last seeded block so
                # no spurious re-DMA happens after the sweep.
                pl.BlockSpec(
                    (tile, f_pad),
                    lambda s, i, k: (
                        jnp.where(jnp.logical_and(s == 0, i == 0), k, pin), 0)),
                # adjacency tile (row i, col k), auto-pipelined, bf16.
                pl.BlockSpec((tile, tile), lambda s, i, k: (i, k)),
                # weights / biases: constant block index -> VMEM-resident.
                pl.BlockSpec((f_pad, h_pad), lambda s, i, k: (0, 0)),
                pl.BlockSpec((1, h_pad), lambda s, i, k: (0, 0)),
                pl.BlockSpec((h_pad, h_pad), lambda s, i, k: (0, 0)),
                pl.BlockSpec((1, h_pad), lambda s, i, k: (0, 0)),
            ],
            out_specs=pl.BlockSpec((tile, h_pad), lambda s, i, k: (i, 0)),
            scratch_shapes=[
                pltpu.VMEM((tile, h_pad), jnp.float32),      # f32 accumulator
                pltpu.VMEM((n_pad, h_pad), jnp.bfloat16),    # y0 gate
                pltpu.VMEM((2 * n_pad, h_pad), jnp.bfloat16),  # y ping-pong
            ]),
        compiler_params=pltpu.CompilerParams(
            # every axis is sequentially dependent through the VMEM-resident
            # y buffers, so no 'parallel' axes here.
            dimension_semantics=("arbitrary", "arbitrary", "arbitrary"),
            vmem_limit_bytes=vmem_limit),
    )(x_p, a_p, wf_p, bf_p, wa_p, ba_p)

    return out[:n, :h]


# ------------------------------------------------------------------- params --

def init_rwkp_params(key, nin, nout, bias=True):
    # PyTorch nn.Linear default init: U(-1/sqrt(fan_in), 1/sqrt(fan_in)).
    k1, k2, k3, k4 = jax.random.split(key, 4)
    sf = 1.0 / float(nin) ** 0.5
    sa = 1.0 / float(nout) ** 0.5
    zeros = lambda n_: jnp.zeros((n_,), jnp.float32)
    return {
        "w_feat": jax.random.uniform(k1, (nin, nout), jnp.float32, -sf, sf),
        "b_feat": (jax.random.uniform(k2, (nout,), jnp.float32, -sf, sf)
                   if bias else zeros(nout)),
        "w_adj": jax.random.uniform(k3, (nout, nout), jnp.float32, -sa, sa),
        "b_adj": (jax.random.uniform(k4, (nout,), jnp.float32, -sa, sa)
                  if bias else zeros(nout)),
    }


# --------------------------------------------------------- pure-JAX reference --

def rwkp_conv_reference(params, x, edge_index, max_step=2):
    # Pure-JAX f32 reference (mirrors the PyTorch forward exactly).
    n = x.shape[0]
    adj = build_normalized_adj_padded(edge_index, n, n, direction="sym",
                                      self_loops=False, dtype=jnp.float32)
    y0 = jax.nn.sigmoid(x @ params["w_feat"] + params["b_feat"])
    y = y0
    for i in range(max_step):
        y = adj @ y
        y = y @ params["w_adj"] + params["b_adj"]
        y = y0 * y
        if i != max_step - 1:
            y = y0 * y
    return y


# ----------------------------------------------------------------------- main --

if __name__ == "__main__":
    n_nodes, n_edges = 256, 1024
    nin, nhid = 16, 32
    max_step = 2

    key = jax.random.PRNGKey(0)
    kx, ke, kea, kp = jax.random.split(key, 4)
    x = jax.random.normal(kx, (n_nodes, nin), jnp.float32)              # data.x
    edge_index = jax.random.randint(ke, (2, n_edges), 0, n_nodes,
                                    dtype=jnp.int32)                    # data.edge_index
    edge_attr = jax.random.normal(kea, (n_edges, 4), jnp.float32)       # unused

    params = init_rwkp_params(kp, nin, nhid, bias=True)

    out = rwkp_conv_forward(params, x, edge_index, edge_attr,
                            max_step=max_step)
    out = jax.block_until_ready(out)
    assert out.shape == (n_nodes, nhid)

    ref = rwkp_conv_reference(params, x, edge_index, max_step=max_step)
    err = float(jnp.max(jnp.abs(out - ref)))
    assert err < 5e-2, f"kernel/reference mismatch: max abs err = {err}"

    print("KERNEL_OK")
</pallas_src>

<mosaic_0001>
module attributes {stable_mosaic.version = 11 : i64} {
  func.func @_rwkp_kernel(%arg0: i32, %arg1: i32, %arg2: i32, %arg3: memref<256x128xbf16, #tpu.memory_space<vmem>>, %arg4: memref<256x256xbf16, #tpu.memory_space<vmem>>, %arg5: memref<128x128xbf16, #tpu.memory_space<vmem>>, %arg6: memref<1x128xf32, #tpu.memory_space<vmem>>, %arg7: memref<128x128xbf16, #tpu.memory_space<vmem>>, %arg8: memref<1x128xf32, #tpu.memory_space<vmem>>, %arg9: memref<256x128xf32, #tpu.memory_space<vmem>>, %arg10: memref<256x128xf32, #tpu.memory_space<vmem>>, %arg11: memref<256x128xbf16, #tpu.memory_space<vmem>>, %arg12: memref<512x128xbf16, #tpu.memory_space<vmem>>) attributes {dimension_semantics = [#tpu.dimension_semantics<arbitrary>, #tpu.dimension_semantics<arbitrary>, #tpu.dimension_semantics<arbitrary>], iteration_bounds = array<i64: 2, 1, 1>, scalar_prefetch = 0 : i64, scratch_operands = 3 : i64, tpu.core_type = #tpu.core_type<tc>, window_params = [{transform_indices = @transform_0, window_bounds = array<i64: 256, 128>}, {transform_indices = @transform_1, window_bounds = array<i64: 256, 256>}, {pipeline_mode = #tpu.pipeline_mode<synchronous>, transform_indices = @transform_2, window_bounds = array<i64: 128, 128>}, {pipeline_mode = #tpu.pipeline_mode<synchronous>, transform_indices = @transform_3, window_bounds = array<i64: 1, 128>}, {pipeline_mode = #tpu.pipeline_mode<synchronous>, transform_indices = @transform_4, window_bounds = array<i64: 128, 128>}, {pipeline_mode = #tpu.pipeline_mode<synchronous>, transform_indices = @transform_5, window_bounds = array<i64: 1, 128>}, {transform_indices = @transform_6, window_bounds = array<i64: 256, 128>}]} {
    %c0_i32 = arith.constant 0 : i32
    %0 = arith.cmpi eq, %arg0, %c0_i32 : i32
    %c0_i32_0 = arith.constant 0 : i32
    %1 = arith.cmpi eq, %arg1, %c0_i32_0 : i32
    %2 = arith.andi %0, %1 : i1
    %3 = arith.extui %2 : i1 to i32
    %c0_i32_1 = arith.constant 0 : i32
    %4 = arith.cmpi ne, %3, %c0_i32_1 : i32
    scf.if %4 {
      %c0_15 = arith.constant 0 : index
      %c0_16 = arith.constant 0 : index
      %32 = vector.load %arg3[%c0_15, %c0_16] : memref<256x128xbf16, #tpu.memory_space<vmem>>, vector<256x128xbf16>
      %c0_17 = arith.constant 0 : index
      %c0_18 = arith.constant 0 : index
      %33 = vector.load %arg5[%c0_17, %c0_18] : memref<128x128xbf16, #tpu.memory_space<vmem>>, vector<128x128xbf16>
      %cst_19 = arith.constant dense<0.000000e+00> : vector<256x128xf32>
      %34 = tpu.matmul %32, %33, %cst_19 {dimension_numbers = #tpu.dot_dimension_numbers<[1], [0], [0], [1], [0, 0, 1, 1], [], []>} : vector<256x128xbf16>, vector<128x128xbf16>, vector<256x128xf32> -> vector<256x128xf32>
      %c0_20 = arith.constant 0 : index
      %c0_21 = arith.constant 0 : index
      %35 = vector.load %arg6[%c0_20, %c0_21] : memref<1x128xf32, #tpu.memory_space<vmem>>, vector<1x128xf32>
      %36 = vector.broadcast %35 : vector<1x128xf32> to vector<256x128xf32>
      %37 = arith.addf %34, %36 : vector<256x128xf32>
      %38 = arith.negf %37 : vector<256x128xf32>
      %39 = math.exp %38 : vector<256x128xf32>
      %cst_22 = arith.constant 1.000000e+00 : f32
      %40 = vector.broadcast %cst_22 : f32 to vector<256x128xf32>
      %41 = arith.addf %40, %39 : vector<256x128xf32>
      %42 = arith.divf %40, %41 : vector<256x128xf32>
      %c256_i32_23 = arith.constant 256 : i32
      %43 = arith.muli %arg2, %c256_i32_23 : i32
      %44 = tpu.assume_multiple %43, 256 : i32
      %45 = arith.truncf %42 : vector<256x128xf32> to vector<256x128xbf16>
      %46 = arith.index_cast %44 : i32 to index
      %c0_24 = arith.constant 0 : index
      %47 = vector.load %arg11[%46, %c0_24] : memref<256x128xbf16, #tpu.memory_space<vmem>>, vector<256x128xbf16>
      tpu.vector_store %arg11[%46, %c0_24], %45 {strides = array<i32>} : memref<256x128xbf16, #tpu.memory_space<vmem>>, vector<256x128xbf16>,
      %48 = arith.truncf %42 : vector<256x128xf32> to vector<256x128xbf16>
      %49 = arith.index_cast %44 : i32 to index
      %c0_25 = arith.constant 0 : index
      %50 = vector.load %arg12[%49, %c0_25] : memref<512x128xbf16, #tpu.memory_space<vmem>>, vector<256x128xbf16>
      tpu.vector_store %arg12[%49, %c0_25], %48 {strides = array<i32>} : memref<512x128xbf16, #tpu.memory_space<vmem>>, vector<256x128xbf16>,
    } else {
    }
    %c2_i32 = arith.constant 2 : i32
    %c0_i32_2 = arith.constant 0 : i32
    %5 = arith.cmpi eq, %c2_i32, %c0_i32_2 : i32
    %c1_i32 = arith.constant 1 : i32
    %6 = arith.select %5, %c1_i32, %c2_i32 : i32
    %7 = arith.remsi %arg0, %6 : i32
    %c0_i32_3 = arith.constant 0 : i32
    %8 = arith.cmpi ne, %7, %c0_i32_3 : i32
    %c0_i32_4 = arith.constant 0 : i32
    %9 = arith.cmpi slt, %7, %c0_i32_4 : i32
    %c0_i32_5 = arith.constant 0 : i32
    %10 = arith.cmpi slt, %6, %c0_i32_5 : i32
    %11 = arith.xori %9, %10 : i1
    %12 = arith.andi %11, %8 : i1
    %13 = arith.addi %7, %6 : i32
    %14 = arith.select %12, %13, %7 : i32
    %c256_i32 = arith.constant 256 : i32
    %15 = arith.muli %14, %c256_i32 : i32
    %c256_i32_6 = arith.constant 256 : i32
    %16 = arith.muli %arg2, %c256_i32_6 : i32
    %17 = arith.addi %15, %16 : i32
    %18 = tpu.assume_multiple %17, 256 : i32
    %c0 = arith.constant 0 : index
    %c0_7 = arith.constant 0 : index
    %19 = vector.load %arg4[%c0, %c0_7] : memref<256x256xbf16, #tpu.memory_space<vmem>>, vector<256x256xbf16>
    %20 = arith.index_cast %18 : i32 to index
    %c0_8 = arith.constant 0 : index
    %21 = vector.load %arg12[%20, %c0_8] : memref<512x128xbf16, #tpu.memory_space<vmem>>, vector<256x128xbf16>
    %cst = arith.constant dense<0.000000e+00> : vector<256x128xf32>
    %22 = tpu.matmul %19, %21, %cst {dimension_numbers = #tpu.dot_dimension_numbers<[1], [0], [0], [1], [0, 0, 1, 1], [], []>} : vector<256x256xbf16>, vector<256x128xbf16>, vector<256x128xf32> -> vector<256x128xf32>
    %c0_i32_9 = arith.constant 0 : i32
    %23 = arith.cmpi eq, %arg2, %c0_i32_9 : i32
    %24 = arith.extui %23 : i1 to i32
    %c0_i32_10 = arith.constant 0 : i32
    %25 = arith.cmpi ne, %24, %c0_i32_10 : i32
    scf.if %25 {
      %c0_15 = arith.constant 0 : index
      %c0_16 = arith.constant 0 : index
      %32 = vector.load %arg10[%c0_15, %c0_16] : memref<256x128xf32, #tpu.memory_space<vmem>>, vector<256x128xf32>
      tpu.vector_store %arg10[%c0_15, %c0_16], %22 {strides = array<i32>} : memref<256x128xf32, #tpu.memory_space<vmem>>, vector<256x128xf32>,
    } else {
    }
    %c0_i32_11 = arith.constant 0 : i32
    %26 = arith.cmpi ne, %arg2, %c0_i32_11 : i32
    %27 = arith.extui %26 : i1 to i32
    %c0_i32_12 = arith.constant 0 : i32
    %28 = arith.cmpi ne, %27, %c0_i32_12 : i32
    scf.if %28 {
      %c0_15 = arith.constant 0 : index
      %c0_16 = arith.constant 0 : index
      %32 = vector.load %arg10[%c0_15, %c0_16] : memref<256x128xf32, #tpu.memory_space<vmem>>, vector<256x128xf32>
      %33 = arith.addf %32, %22 : vector<256x128xf32>
      %c0_17 = arith.constant 0 : index
      %c0_18 = arith.constant 0 : index
      %34 = vector.load %arg10[%c0_17, %c0_18] : memref<256x128xf32, #tpu.memory_space<vmem>>, vector<256x128xf32>
      tpu.vector_store %arg10[%c0_17, %c0_18], %33 {strides = array<i32>} : memref<256x128xf32, #tpu.memory_space<vmem>>, vector<256x128xf32>,
    } else {
    }
    %c0_i32_13 = arith.constant 0 : i32
    %29 = arith.cmpi eq, %arg2, %c0_i32_13 : i32
    %30 = arith.extui %29 : i1 to i32
    %c0_i32_14 = arith.constant 0 : i32
    %31 = arith.cmpi ne, %30, %c0_i32_14 : i32
    scf.if %31 {
      %c0_15 = arith.constant 0 : index
      %c0_16 = arith.constant 0 : index
      %32 = vector.load %arg10[%c0_15, %c0_16] : memref<256x128xf32, #tpu.memory_space<vmem>>, vector<256x128xf32>
      %33 = arith.truncf %32 : vector<256x128xf32> to vector<256x128xbf16>
      %c0_17 = arith.constant 0 : index
      %c0_18 = arith.constant 0 : index
      %34 = vector.load %arg7[%c0_17, %c0_18] : memref<128x128xbf16, #tpu.memory_space<vmem>>, vector<128x128xbf16>
      %cst_19 = arith.constant dense<0.000000e+00> : vector<256x128xf32>
      %35 = tpu.matmul %33, %34, %cst_19 {dimension_numbers = #tpu.dot_dimension_numbers<[1], [0], [0], [1], [0, 0, 1, 1], [], []>} : vector<256x128xbf16>, vector<128x128xbf16>, vector<256x128xf32> -> vector<256x128xf32>
      %c0_20 = arith.constant 0 : index
      %c0_21 = arith.constant 0 : index
      %36 = vector.load %arg8[%c0_20, %c0_21] : memref<1x128xf32, #tpu.memory_space<vmem>>, vector<1x128xf32>
      %37 = vector.broadcast %36 : vector<1x128xf32> to vector<256x128xf32>
      %38 = arith.addf %35, %37 : vector<256x128xf32>
      %c256_i32_22 = arith.constant 256 : i32
      %39 = arith.muli %arg1, %c256_i32_22 : i32
      %40 = tpu.assume_multiple %39, 256 : i32
      %41 = arith.index_cast %40 : i32 to index
      %c0_23 = arith.constant 0 : index
      %42 = vector.load %arg11[%41, %c0_23] : memref<256x128xbf16, #tpu.memory_space<vmem>>, vector<256x128xbf16>
      %43 = arith.extf %42 : vector<256x128xbf16> to vector<256x128xf32>
      %44 = arith.mulf %43, %38 : vector<256x128xf32>
      %c1_i32_24 = arith.constant 1 : i32
      %45 = arith.cmpi eq, %arg0, %c1_i32_24 : i32
      %46 = arith.extf %42 : vector<256x128xbf16> to vector<256x128xf32>
      %47 = arith.mulf %46, %44 : vector<256x128xf32>
      %48 = arith.select %45, %44, %47 : vector<256x128xf32>
      %c1_i32_25 = arith.constant 1 : i32
      %49 = arith.subi %c1_i32_25, %14 : i32
      %c256_i32_26 = arith.constant 256 : i32
      %50 = arith.muli %49, %c256_i32_26 : i32
      %c256_i32_27 = arith.constant 256 : i32
      %51 = arith.muli %arg1, %c256_i32_27 : i32
      %52 = arith.addi %50, %51 : i32
      %53 = tpu.assume_multiple %52, 256 : i32
      %54 = arith.truncf %48 : vector<256x128xf32> to vector<256x128xbf16>
      %55 = arith.index_cast %53 : i32 to index
      %c0_28 = arith.constant 0 : index
      %56 = vector.load %arg12[%55, %c0_28] : memref<512x128xbf16, #tpu.memory_space<vmem>>, vector<256x128xbf16>
      tpu.vector_store %arg12[%55, %c0_28], %54 {strides = array<i32>} : memref<512x128xbf16, #tpu.memory_space<vmem>>, vector<256x128xbf16>,
      %c0_29 = arith.constant 0 : index
      %c0_30 = arith.constant 0 : index
      %57 = vector.load %arg9[%c0_29, %c0_30] : memref<256x128xf32, #tpu.memory_space<vmem>>, vector<256x128xf32>
      tpu.vector_store %arg9[%c0_29, %c0_30], %48 {strides = array<i32>} : memref<256x128xf32, #tpu.memory_space<vmem>>, vector<256x128xf32>,
    } else {
    }
    return
  }
  func.func @transform_0(%arg0: i32, %arg1: i32, %arg2: i32) -> (i32, i32) {
    %c0_i32 = arith.constant 0 : i32
    %0 = arith.cmpi eq, %arg0, %c0_i32 : i32
    %c0_i32_0 = arith.constant 0 : i32
    %1 = arith.cmpi eq, %arg1, %c0_i32_0 : i32
    %2 = arith.andi %0, %1 : i1
    %c0_i32_1 = arith.constant 0 : i32
    %3 = arith.select %2, %arg2, %c0_i32_1 : i32
    %c0_i32_2 = arith.constant 0 : i32
    %c0_i32_3 = arith.constant 0 : i32
    return %3, %c0_i32_2 : i32, i32
  }
  func.func @transform_1(%arg0: i32, %arg1: i32, %arg2: i32) -> (i32, i32) {
    %c0_i32 = arith.constant 0 : i32
    return %arg1, %arg2 : i32, i32
  }
  func.func @transform_2(%arg0: i32, %arg1: i32, %arg2: i32) -> (i32, i32) {
    %c0_i32 = arith.constant 0 : i32
    %c0_i32_0 = arith.constant 0 : i32
    %c0_i32_1 = arith.constant 0 : i32
    return %c0_i32, %c0_i32_0 : i32, i32
  }
  func.func @transform_3(%arg0: i32, %arg1: i32, %arg2: i32) -> (i32, i32) {
    %c0_i32 = arith.constant 0 : i32
    %c0_i32_0 = arith.constant 0 : i32
    %c0_i32_1 = arith.constant 0 : i32
    return %c0_i32, %c0_i32_0 : i32, i32
  }
  func.func @transform_4(%arg0: i32, %arg1: i32, %arg2: i32) -> (i32, i32) {
    %c0_i32 = arith.constant 0 : i32
    %c0_i32_0 = arith.constant 0 : i32
    %c0_i32_1 = arith.constant 0 : i32
    return %c0_i32, %c0_i32_0 : i32, i32
  }
  func.func @transform_5(%arg0: i32, %arg1: i32, %arg2: i32) -> (i32, i32) {
    %c0_i32 = arith.constant 0 : i32
    %c0_i32_0 = arith.constant 0 : i32
    %c0_i32_1 = arith.constant 0 : i32
    return %c0_i32, %c0_i32_0 : i32, i32
  }
  func.func @transform_6(%arg0: i32, %arg1: i32, %arg2: i32) -> (i32, i32) {
    %c0_i32 = arith.constant 0 : i32
    %c0_i32_0 = arith.constant 0 : i32
    return %arg1, %c0_i32 : i32, i32
  }
}

</mosaic_0001>

<llo_original>
// kernel: tpu_custom_call.1
$region0: #{tpu_custom_call.1}
  #allocation0 [shape = 'u32[]', space=smem, size = 0x4, offset = 0x4, fixed_abs, tag = 'smem constant byte address 0x4 - core index']
  #allocation1 [shape = 'u32[144,128]{1,0:T(1,128)}', space=vmem, size = 0x12000, scoped, tag = 'internal scratch']
  #allocation2 [shape = 'f32[256,128]{1,0:T(8,128)}', space=vmem, size = 0x20000, scoped, tag = 'scratch operand']
  #allocation3 [shape = 'bf16[256,128]{1,0:T(16,128)(2,1)}', space=vmem, size = 0x10000, scoped, tag = 'scratch operand']
  #allocation4 [shape = 'bf16[512,128]{1,0:T(16,128)(2,1)}', space=vmem, size = 0x20000, scoped, tag = 'scratch operand']
  %s0 = inlined_call_operand.hbm [shape: bf16[256,128], index: 0, kind: input, shape index: {}]
  %s1 = inlined_call_operand.hbm [shape: bf16[256,256], index: 1, kind: input, shape index: {}]
  %s2 = inlined_call_operand.hbm [shape: bf16[128,128], index: 2, kind: input, shape index: {}]
  %s3 = inlined_call_operand.vmem [shape: f32[1,128], index: 3, kind: input, shape index: {}]
  %s4 = inlined_call_operand.hbm [shape: bf16[128,128], index: 4, kind: input, shape index: {}]
  %s5 = inlined_call_operand.vmem [shape: f32[1,128], index: 5, kind: input, shape index: {}]
  %s6 = inlined_call_operand.hbm [shape: f32[256,128], index: 6, kind: output, shape index: {}]
  %s7 = sld [smem:[#allocation0]]
  $region89: #{tpu_custom_call.1} parent=0
    _
  %s9 = ssub.s32 1, %s7
  %s10 = scalar_select 0, %s9, %s7
  $region1: #{tpu_custom_call.1} parent=0
    #allocation5 [shape = 'u8[131072]{0}', space=vmem, size = 0x20000, scoped, tag = 'input window, operand 0']
    #allocation6 [shape = 's32[2]{0}', space=sflag, size = 0x8, scoped, tag = 'scoped memory for tpu_custom_call.1']
    #allocation7 [shape = 's32[2]{0}', space=sflag, size = 0x8, scoped, tag = 'scoped memory for tpu_custom_call.1']
    #allocation8 [shape = 'u8[131072]{0}', space=vmem, size = 0x20000, scoped, tag = 'input window, operand 1, single buffered']
    #allocation9 [shape = 's32[1]{0}', space=sflag, size = 0x4, scoped, tag = 'scoped memory for tpu_custom_call.1']
    #allocation10 [shape = 'u8[32768]{0}', space=vmem, size = 0x8000, scoped, tag = 'input window, operand 2, single buffered']
    #allocation11 [shape = 'u8[32768]{0}', space=vmem, size = 0x8000, scoped, tag = 'input window, operand 4, single buffered']
    #allocation12 [shape = 's32[1]{0}', space=sflag, size = 0x4, scoped, tag = 'scoped memory for tpu_custom_call.1']
    #allocation13 [shape = 'u8[131072]{0}', space=vmem, size = 0x20000, scoped, tag = 'output window, operand 0, single buffered']
    %11 = vsyncpa [#allocation6], 0
    %s12 = scalar_lea.sflag [#allocation6], 1
    %13 = vsyncpa %s12, 0
    %14 = vsyncpa [#allocation9], 0
    %15 = vsyncpa [#allocation12], 0
    %16 = vsyncpa [#allocation7], 0
    loop: start=0, step=1, limit=4
    $region2: #{tpu_custom_call.1} parent=1 // loop_pre_header
      _
    $region3: #{tpu_custom_call.1} parent=1 // loop_header
      %s18 = sphi 0, %s22
      %p19 = scmp.ge.s32.totalorder %s18, 4
      %s25 = sphi 0, %s44
      %s26 = sphi 0, %s40
      %s27 = sphi 0, %s36
      %s28 = sphi 0, %s25
      %s29 = sphi 0, %s26
      %s30 = sphi 0, %s27
      %s31 = sphi 0, %s28
      %s32 = sphi 0, %s29
      %s33 = sphi 0, %s30
      %s57 = sphi 0, %s59
      %s60 = sphi 0, %s57
      %s61 = sphi 0, %s60
      %s77 = sphi 0, %s61
      %s85 = sphi 0, %s87
      %s88 = sphi 0, %s85
      %s89 = sphi 0, %s88
      %s105 = sphi 0, %s89
      %s109 = sphi 0, %s109
      %s111 = sphi 0, %s109
      %s112 = sphi 0, %s111
      %s126 = sphi 0, %s112
      %s130 = sphi 0, %s130
      %s132 = sphi 0, %s130
      %s133 = sphi 0, %s132
      %s147 = sphi 0, %s133
      %s151 = sphi 0, %s151
      %s153 = sphi 0, %s151
      %s154 = sphi 0, %s153
      %s168 = sphi 0, %s154
      %s172 = sphi 0, %s172
      %s174 = sphi 0, %s172
      %s175 = sphi 0, %s174
      %s189 = sphi 0, %s175
      %s195 = sphi 0, %s197
      %s198 = sphi 0, %s195
      %s199 = sphi 0, %s198
      %s215 = sphi 0, %s199
    $region4: #{tpu_custom_call.1} parent=1 // loop_header_branch
      %21 = sbr.rel (%p19) target = $region8
    $region5: #{tpu_custom_call.1} parent=1 // loop_body
      %s23 = ssub.s32 %s18, 1
      %s24 = ssub.s32 %s18, 2
      %s34 = sadd.s32 1, %s27
      %p35 = scmp.ge.s32.totalorder %s34, 1
      %s36 = scalar_select %p35, 0, %s34
      %s37 = sadd.s32 1, %s26
      %s38 = scalar_select %p35, %s37, %s26
      %p39 = scmp.ge.s32.totalorder %s38, 1
      %s40 = scalar_select %p39, 0, %s38
      %s41 = sadd.s32 1, %s25
      %s42 = scalar_select %p39, %s41, %s25
      %p43 = scmp.ge.s32.totalorder %s42, 2
      %s44 = scalar_select %p43, 0, %s42
      %p45 = scmp.eq.s32.totalorder %s25, 0
      %p46 = scmp.eq.s32.totalorder %s26, 0
      %p47 = pnand %p45, %p46
      %p48 = pneg %p47
      %s49 = scalar_select %p48, %s27, 0
      %p50 = scmp.eq.s32.totalorder %s44, 0
      %p51 = scmp.eq.s32.totalorder %s40, 0
      %p52 = pnand %p50, %p51
      %p53 = pneg %p52
      %s54 = scalar_select %p53, %s36, 0
      %s55 = ssub.s32 %s49, %s54
      %p56 = scmp.eq.s32.totalorder %s55, 0
      %s58 = sadd.s32 %s57, 1
      %s59 = scalar_select %p56, %s57, %s58
      %p62 = pneg %p56
      %p63 = scmp.eq.s32.totalorder %s18, 1
      %p64 = por %p62, %p63
      %p65 = scmp.ne.s32.totalorder %s57, %s60
      %p66 = scmp.eq.s32.totalorder %s18, 0
      %p67 = por %p65, %p66
      %p68 = scmp.ne.s32.totalorder %s57, %s60
      %p69 = scmp.eq.s32.totalorder %s23, 1
      %p70 = por %p68, %p69
      %p71 = scmp.ne.s32.totalorder %s60, %s61
      %p72 = scmp.eq.s32.totalorder %s23, 0
      %p73 = por %p71, %p72
      %p74 = scmp.ne.s32.totalorder %s60, %s61
      %p75 = scmp.eq.s32.totalorder %s24, 1
      %p76 = por %p74, %p75
      %p78 = scmp.ne.s32.totalorder %s61, %s77
      %p79 = scmp.eq.s32.totalorder %s24, 0
      %p80 = por %p78, %p79
      %s81 = ssub.s32 %s26, %s40
      %s82 = ssub.s32 %s27, %s36
      %s83 = sor.u32 %s81, %s82
      %p84 = scmp.eq.s32.totalorder %s83, 0
      %s86 = sadd.s32 %s85, 1
      %s87 = scalar_select %p84, %s85, %s86
      %p90 = pneg %p84
      %p91 = scmp.eq.s32.totalorder %s18, 1
      %p92 = por %p90, %p91
      %p93 = scmp.ne.s32.totalorder %s85, %s88
      %p94 = scmp.eq.s32.totalorder %s18, 0
      %p95 = por %p93, %p94
      %p96 = scmp.ne.s32.totalorder %s85, %s88
      %p97 = scmp.eq.s32.totalorder %s23, 1
      %p98 = por %p96, %p97
      %p99 = scmp.ne.s32.totalorder %s88, %s89
      %p100 = scmp.eq.s32.totalorder %s23, 0
      %p101 = por %p99, %p100
      %p102 = scmp.ne.s32.totalorder %s88, %s89
      %p103 = scmp.eq.s32.totalorder %s24, 1
      %p104 = por %p102, %p103
      %p106 = scmp.ne.s32.totalorder %s89, %s105
      %p107 = scmp.eq.s32.totalorder %s24, 0
      %p108 = por %p106, %p107
      %s110 = sadd.s32 %s109, 1
      %p113 = scmp.eq.s32.totalorder %s18, 1
      %p114 = scmp.ne.s32.totalorder %s109, %s111
      %p115 = scmp.eq.s32.totalorder %s18, 0
      %p116 = por %p114, %p115
      %p117 = scmp.ne.s32.totalorder %s109, %s111
      %p118 = scmp.eq.s32.totalorder %s23, 1
      %p119 = por %p117, %p118
      %p120 = scmp.ne.s32.totalorder %s111, %s112
      %p121 = scmp.eq.s32.totalorder %s23, 0
      %p122 = por %p120, %p121
      %p123 = scmp.ne.s32.totalorder %s111, %s112
      %p124 = scmp.eq.s32.totalorder %s24, 1
      %p125 = por %p123, %p124
      %p127 = scmp.ne.s32.totalorder %s112, %s126
      %p128 = scmp.eq.s32.totalorder %s24, 0
      %p129 = por %p127, %p128
      %s131 = sadd.s32 %s130, 1
      %p134 = scmp.eq.s32.totalorder %s18, 1
      %p135 = scmp.ne.s32.totalorder %s130, %s132
      %p136 = scmp.eq.s32.totalorder %s18, 0
      %p137 = por %p135, %p136
      %p138 = scmp.ne.s32.totalorder %s130, %s132
      %p139 = scmp.eq.s32.totalorder %s23, 1
      %p140 = por %p138, %p139
      %p141 = scmp.ne.s32.totalorder %s132, %s133
      %p142 = scmp.eq.s32.totalorder %s23, 0
      %p143 = por %p141, %p142
      %p144 = scmp.ne.s32.totalorder %s132, %s133
      %p145 = scmp.eq.s32.totalorder %s24, 1
      %p146 = por %p144, %p145
      %p148 = scmp.ne.s32.totalorder %s133, %s147
      %p149 = scmp.eq.s32.totalorder %s24, 0
      %p150 = por %p148, %p149
      %s152 = sadd.s32 %s151, 1
      %p155 = scmp.eq.s32.totalorder %s18, 1
      %p156 = scmp.ne.s32.totalorder %s151, %s153
      %p157 = scmp.eq.s32.totalorder %s18, 0
      %p158 = por %p156, %p157
      %p159 = scmp.ne.s32.totalorder %s151, %s153
      %p160 = scmp.eq.s32.totalorder %s23, 1
      %p161 = por %p159, %p160
      %p162 = scmp.ne.s32.totalorder %s153, %s154
      %p163 = scmp.eq.s32.totalorder %s23, 0
      %p164 = por %p162, %p163
      %p165 = scmp.ne.s32.totalorder %s153, %s154
      %p166 = scmp.eq.s32.totalorder %s24, 1
      %p167 = por %p165, %p166
      %p169 = scmp.ne.s32.totalorder %s154, %s168
      %p170 = scmp.eq.s32.totalorder %s24, 0
      %p171 = por %p169, %p170
      %s173 = sadd.s32 %s172, 1
      %p176 = scmp.eq.s32.totalorder %s18, 1
      %p177 = scmp.ne.s32.totalorder %s172, %s174
      %p178 = scmp.eq.s32.totalorder %s18, 0
      %p179 = por %p177, %p178
      %p180 = scmp.ne.s32.totalorder %s172, %s174
      %p181 = scmp.eq.s32.totalorder %s23, 1
      %p182 = por %p180, %p181
      %p183 = scmp.ne.s32.totalorder %s174, %s175
      %p184 = scmp.eq.s32.totalorder %s23, 0
      %p185 = por %p183, %p184
      %p186 = scmp.ne.s32.totalorder %s174, %s175
      %p187 = scmp.eq.s32.totalorder %s24, 1
      %p188 = por %p186, %p187
      %p190 = scmp.ne.s32.totalorder %s175, %s189
      %p191 = scmp.eq.s32.totalorder %s24, 0
      %p192 = por %p190, %p191
      %s193 = ssub.s32 %s26, %s40
      %p194 = scmp.eq.s32.totalorder %s193, 0
      %s196 = sadd.s32 %s195, 1
      %s197 = scalar_select %p194, %s195, %s196
      %p200 = pneg %p194
      %p201 = scmp.eq.s32.totalorder %s18, 1
      %p202 = por %p200, %p201
      %p203 = scmp.ne.s32.totalorder %s195, %s198
      %p204 = scmp.eq.s32.totalorder %s18, 0
      %p205 = por %p203, %p204
      %p206 = scmp.ne.s32.totalorder %s195, %s198
      %p207 = scmp.eq.s32.totalorder %s23, 1
      %p208 = por %p206, %p207
      %p209 = scmp.ne.s32.totalorder %s198, %s199
      %p210 = scmp.eq.s32.totalorder %s23, 0
      %p211 = por %p209, %p210
      %p212 = scmp.ne.s32.totalorder %s198, %s199
      %p213 = scmp.eq.s32.totalorder %s24, 1
      %p214 = por %p212, %p213
      %p216 = scmp.ne.s32.totalorder %s199, %s215
      %p217 = scmp.eq.s32.totalorder %s24, 0
      %p218 = por %p216, %p217
      %p219 = scmp.le.s32.totalorder 1, %s18
      %p220 = scmp.lt.s32.totalorder %s18, 3
      %p221 = pnand %p219, %p220
      %p222 = pneg %p221
      // Predicated region
      $region9: #{tpu_custom_call.1} parent=5 // pred_check
        _
      $region10: #{tpu_custom_call.1} parent=5 // pred_check_branch
        %224 = sbr.rel (%p221) target = $region12
      $region11: #{tpu_custom_call.1} parent=5 // pred_region
        %s225 = ssub.s32 %s18, 1
        // Predicated region
        $region13: #{tpu_custom_call.1} parent=11 // pred_check
          %p226 = pneg %p101
        $region14: #{tpu_custom_call.1} parent=11 // pred_check_branch
          %228 = sbr.rel (%p226) target = $region16
        $region15: #{tpu_custom_call.1} parent=11 // pred_region
          %s229 = smul.u32 32, %s29
          %s230 = smul.u32 2, %s30
          %s232 = ssub.s32 4096, 4096
          %233 = vsyncadd [#allocation9], %s232
          %s234 = smul.addr %s229, 2
          %s235 = sadd.s32 %s230, %s234
          %s236 = smul.addr %s235, 64
          %s237 = scalar_lea.hbm %s1, %s236
          %s238 = sshll.u32 [#allocation8], 4
          %s239 = int_to_ptr.vmem [resolvable:$true] %s238
          %244 = dma.hbm_to_vmem [thread:$0]  %s237, 4096, %s239, [#allocation9], 128, 128, 8
        $region16: #{tpu_custom_call.1} parent=11 // pred_fallthru
          _
        // Predicated region
        $region17: #{tpu_custom_call.1} parent=11 // pred_check
          %p245 = pneg %p122
        $region18: #{tpu_custom_call.1} parent=11 // pred_check_branch
          %247 = sbr.rel (%p245) target = $region20
        $region19: #{tpu_custom_call.1} parent=11 // pred_region
          %s249 = ssub.s32 1024, 1024
          %250 = vsyncadd [#allocation9], %s249
          %s251 = sshll.u32 [#allocation10], 4
          %s252 = int_to_ptr.vmem [resolvable:$true] %s251
          %257 = dma.hbm_to_vmem [thread:$0]  %s2, 1024, %s252, [#allocation9], 64, 64, 4
        $region20: #{tpu_custom_call.1} parent=11 // pred_fallthru
          _
        // Predicated region
        $region21: #{tpu_custom_call.1} parent=11 // pred_check
          %p258 = pneg %p143
        $region22: #{tpu_custom_call.1} parent=11 // pred_check_branch
          %260 = sbr.rel (%p258) target = $region24
        $region23: #{tpu_custom_call.1} parent=11 // pred_region
          _
        $region24: #{tpu_custom_call.1} parent=11 // pred_fallthru
          _
        // Predicated region
        $region25: #{tpu_custom_call.1} parent=11 // pred_check
          %p261 = pneg %p164
        $region26: #{tpu_custom_call.1} parent=11 // pred_check_branch
          %263 = sbr.rel (%p261) target = $region28
        $region27: #{tpu_custom_call.1} parent=11 // pred_region
          %s265 = ssub.s32 1024, 1024
          %266 = vsyncadd [#allocation12], %s265
          %s267 = sshll.u32 [#allocation11], 4
          %s268 = int_to_ptr.vmem [resolvable:$true] %s267
          %273 = dma.hbm_to_vmem [thread:$0]  %s4, 1024, %s268, [#allocation12], 64, 64, 4
        $region28: #{tpu_custom_call.1} parent=11 // pred_fallthru
          _
        // Predicated region
        $region29: #{tpu_custom_call.1} parent=11 // pred_check
          %p274 = pneg %p185
        $region30: #{tpu_custom_call.1} parent=11 // pred_check_branch
          %276 = sbr.rel (%p274) target = $region32
        $region31: #{tpu_custom_call.1} parent=11 // pred_region
          _
        $region32: #{tpu_custom_call.1} parent=11 // pred_fallthru
          _
      $region12: #{tpu_custom_call.1} parent=5 // pred_fallthru
        _
      %p277 = scmp.lt.s32.totalorder %s18, 2
      // Predicated region
      $region33: #{tpu_custom_call.1} parent=5 // pred_check
        %p278 = pneg %p277
      $region34: #{tpu_custom_call.1} parent=5 // pred_check_branch
        %280 = sbr.rel (%p278) target = $region36
      $region35: #{tpu_custom_call.1} parent=5 // pred_region
        // Predicated region
        $region37: #{tpu_custom_call.1} parent=35 // pred_check
          %p281 = pneg %p67
        $region38: #{tpu_custom_call.1} parent=35 // pred_check_branch
          %283 = sbr.rel (%p281) target = $region40
        $region39: #{tpu_custom_call.1} parent=35 // pred_region
          %s284 = sand.u32 %s57, 1
          %s285 = scalar_lea.sflag [#allocation6], %s284
          %s286 = sand.u32 %s57, 1
          %s287 = smul.addr %s286, 128
          %s288 = scalar_lea.vmem [#allocation5], %s287
          %p289 = scmp.eq.s32.totalorder %s25, 0
          %p290 = scmp.eq.s32.totalorder %s26, 0
          %p291 = pnand %p289, %p290
          %p292 = pneg %p291
          %s293 = scalar_select %p292, %s27, 0
          %s294 = smul.u32 32, %s293
          %s296 = ssub.s32 2048, 2048
          %297 = vsyncadd %s285, %s296
          %s298 = smul.addr %s294, 64
          %s299 = scalar_lea.hbm %s0, %s298
          %s300 = sshll.u32 %s288, 4
          %s301 = int_to_ptr.vmem [resolvable:$true] %s300
          %306 = dma.hbm_to_vmem [thread:$0]  %s299, 2048, %s301, %s285, 64, 64, 4
        $region40: #{tpu_custom_call.1} parent=35 // pred_fallthru
          _
      $region36: #{tpu_custom_call.1} parent=5 // pred_fallthru
        _
      %p307 = scmp.le.s32.totalorder 1, %s18
      %p308 = scmp.lt.s32.totalorder %s18, 3
      %p309 = pnand %p307, %p308
      %p310 = pneg %p309
      // Predicated region
      $region41: #{tpu_custom_call.1} parent=5 // pred_check
        _
      $region42: #{tpu_custom_call.1} parent=5 // pred_check_branch
        %312 = sbr.rel (%p309) target = $region44
      $region43: #{tpu_custom_call.1} parent=5 // pred_region
        %s313 = ssub.s32 %s18, 1
        %s314 = sand.u32 %s60, 1
        %s315 = scalar_lea.sflag [#allocation6], %s314
        %s316 = sand.u32 %s60, 1
        %s317 = smul.addr %s316, 128
        %s318 = scalar_lea.vmem [#allocation5], %s317
        // Predicated region
        $region45: #{tpu_custom_call.1} parent=43 // pred_check
          %p319 = pneg %p73
        $region46: #{tpu_custom_call.1} parent=43 // pred_check_branch
          %321 = sbr.rel (%p319) target = $region48
        $region47: #{tpu_custom_call.1} parent=43 // pred_region
          %322 = dma.done %s315, 2048
        $region48: #{tpu_custom_call.1} parent=43 // pred_fallthru
          _
        // Predicated region
        $region49: #{tpu_custom_call.1} parent=43 // pred_check
          %p323 = pneg %p101
        $region50: #{tpu_custom_call.1} parent=43 // pred_check_branch
          %325 = sbr.rel (%p323) target = $region52
        $region51: #{tpu_custom_call.1} parent=43 // pred_region
          %326 = dma.done [#allocation9], 4096
        $region52: #{tpu_custom_call.1} parent=43 // pred_fallthru
          _
        // Predicated region
        $region53: #{tpu_custom_call.1} parent=43 // pred_check
          %p327 = pneg %p122
        $region54: #{tpu_custom_call.1} parent=43 // pred_check_branch
          %329 = sbr.rel (%p327) target = $region56
        $region55: #{tpu_custom_call.1} parent=43 // pred_region
          %330 = dma.done [#allocation9], 1024
        $region56: #{tpu_custom_call.1} parent=43 // pred_fallthru
          _
        // Predicated region
        $region57: #{tpu_custom_call.1} parent=43 // pred_check
          %p331 = pneg %p164
        $region58: #{tpu_custom_call.1} parent=43 // pred_check_branch
          %333 = sbr.rel (%p331) target = $region60
        $region59: #{tpu_custom_call.1} parent=43 // pred_region
          %334 = dma.done [#allocation12], 1024
        $region60: #{tpu_custom_call.1} parent=43 // pred_fallthru
          _
        %s335 = sand.u32 %s60, 1
        %s336 = scalar_lea.sflag [#allocation6], %s335
        %s337 = sand.u32 %s60, 1
        %s338 = smul.addr %s337, 128
        %s339 = scalar_lea.vmem [#allocation5], %s338
        %p340 = pneg %p73
        %p341 = pneg %p70
        %p342 = pneg %p101
        %p343 = pneg %p98
        %p344 = pneg %p122
        %p345 = pneg %p119
        %p346 = pneg %p143
        %p347 = pneg %p140
        %p348 = pneg %p164
        %p349 = pneg %p161
        %p350 = pneg %p185
        %p351 = pneg %p182
        %p352 = pneg %p211
        %p353 = pneg %p208
        %p354 = scmp.eq.s32.totalorder %s28, 0
        %p355 = scmp.eq.s32.totalorder %s29, 0
        %p356 = pnand %p354, %p355
        %p357 = pneg %p356
        %s358 = scalar_select %p357, %s30, 0
        %s359 = smul.u32 32, %s358
        %s360 = smul.u32 32, %s29
        %s361 = smul.u32 2, %s30
        %s362 = smul.u32 32, %s29
        %p364 = scmp.eq.s32.totalorder %s28, 0
        %p365 = scmp.eq.s32.totalorder %s29, 0
        %p366 = pnand %p364, %p365
        %p367 = pneg %p366
        // Predicated region
        $region61: #{tpu_custom_call.1} parent=43 // pred_check
          _
        $region62: #{tpu_custom_call.1} parent=43 // pred_check_branch
          %369 = sbr.rel (%p366) target = $region64
        $region63: #{tpu_custom_call.1} parent=43 // pred_region
          %v370 = vld [vmem:[%s318] sm:$0xf]
          %v371 = vld [vmem:[%s318 + $0x4] sm:$0xf]
          %v372 = vld [vmem:[%s318 + $0x8] sm:$0xf]
          %v373 = vld [vmem:[%s318 + $0xc] sm:$0xf]
          %v374 = vld [vmem:[%s318 + $0x10] sm:$0xf]
          %v375 = vld [vmem:[%s318 + $0x14] sm:$0xf]
          %v376 = vld [vmem:[%s318 + $0x18] sm:$0xf]
          %v377 = vld [vmem:[%s318 + $0x1c] sm:$0xf]
          %v378 = vld [vmem:[%s318 + $0x20] sm:$0xf]
          %v379 = vld [vmem:[%s318 + $0x24] sm:$0xf]
          %v380 = vld [vmem:[%s318 + $0x28] sm:$0xf]
          %v381 = vld [vmem:[%s318 + $0x2c] sm:$0xf]
          %v382 = vld [vmem:[%s318 + $0x30] sm:$0xf]
          %v383 = vld [vmem:[%s318 + $0x34] sm:$0xf]
          %v384 = vld [vmem:[%s318 + $0x38] sm:$0xf]
          %v385 = vld [vmem:[%s318 + $0x3c] sm:$0xf]
          %v386 = vld [vmem:[%s318 + $0x40] sm:$0xf]
          %v387 = vld [vmem:[%s318 + $0x44] sm:$0xf]
          %v388 = vld [vmem:[%s318 + $0x48] sm:$0xf]
          %v389 = vld [vmem:[%s318 + $0x4c] sm:$0xf]
          %v390 = vld [vmem:[%s318 + $0x50] sm:$0xf]
          %v391 = vld [vmem:[%s318 + $0x54] sm:$0xf]
          %v392 = vld [vmem:[%s318 + $0x58] sm:$0xf]
          %v393 = vld [vmem:[%s318 + $0x5c] sm:$0xf]
          %v394 = vld [vmem:[%s318 + $0x60] sm:$0xf]
          %v395 = vld [vmem:[%s318 + $0x64] sm:$0xf]
          %v396 = vld [vmem:[%s318 + $0x68] sm:$0xf]
          %v397 = vld [vmem:[%s318 + $0x6c] sm:$0xf]
          %v398 = vld [vmem:[%s318 + $0x70] sm:$0xf]
          %v399 = vld [vmem:[%s318 + $0x74] sm:$0xf]
          %v400 = vld [vmem:[%s318 + $0x78] sm:$0xf]
          %v401 = vld [vmem:[%s318 + $0x7c] sm:$0xf]
          %v402 = vld [vmem:[#allocation10] sm:$0xf]
          %v403 = vld [vmem:[#allocation10 + $0x4] sm:$0xf]
          %v404 = vld [vmem:[#allocation10 + $0x8] sm:$0xf]
          %v405 = vld [vmem:[#allocation10 + $0xc] sm:$0xf]
          %v406 = vld [vmem:[#allocation10 + $0x10] sm:$0xf]
          %v407 = vld [vmem:[#allocation10 + $0x14] sm:$0xf]
          %v408 = vld [vmem:[#allocation10 + $0x18] sm:$0xf]
          %v409 = vld [vmem:[#allocation10 + $0x1c] sm:$0xf]
          %v410 = vld [vmem:[#allocation10 + $0x20] sm:$0xf]
          %v411 = vld [vmem:[#allocation10 + $0x24] sm:$0xf]
          %v412 = vld [vmem:[#allocation10 + $0x28] sm:$0xf]
          %v413 = vld [vmem:[#allocation10 + $0x2c] sm:$0xf]
          %v414 = vld [vmem:[#allocation10 + $0x30] sm:$0xf]
          %v415 = vld [vmem:[#allocation10 + $0x34] sm:$0xf]
          %v416 = vld [vmem:[#allocation10 + $0x38] sm:$0xf]
          %v417 = vld [vmem:[#allocation10 + $0x3c] sm:$0xf]
          %v418 = vld [vmem:[%s3] sm:$0x1]
          %v420 = vlaneseq
          %v421 = vshrl.u32 %v420, 7
          %v422 = vsub.s32 0, %v421
          %v423 = vrot.slane %v418, %v422
          %v457 = vunpack.c.l.b16 %v370
          %v458 = vunpack.c.l.b16 %v371
          %v459 = vunpack.c.l.b16 %v372
          %v460 = vunpack.c.l.b16 %v373
          %v461 = vunpack.c.l.b16 %v374
          %v462 = vunpack.c.l.b16 %v375
          %v463 = vunpack.c.l.b16 %v376
          %v464 = vunpack.c.l.b16 %v377
          %v465 = vunpack.c.l.b16 %v378
          %v466 = vunpack.c.l.b16 %v379
          %v467 = vunpack.c.l.b16 %v380
          %v468 = vunpack.c.l.b16 %v381
          %v469 = vunpack.c.l.b16 %v382
          %v470 = vunpack.c.l.b16 %v383
          %v471 = vunpack.c.l.b16 %v384
          %v472 = vunpack.c.l.b16 %v385
          %v473 = vunpack.c.l.b16 %v386
          %v474 = vunpack.c.l.b16 %v387
          %v475 = vunpack.c.l.b16 %v388
          %v476 = vunpack.c.l.b16 %v389
          %v477 = vunpack.c.l.b16 %v390
          %v478 = vunpack.c.l.b16 %v391
          %v479 = vunpack.c.l.b16 %v392
          %v480 = vunpack.c.l.b16 %v393
          %v481 = vunpack.c.l.b16 %v394
          %v482 = vunpack.c.l.b16 %v395
          %v483 = vunpack.c.l.b16 %v396
          %v484 = vunpack.c.l.b16 %v397
          %v485 = vunpack.c.l.b16 %v398
          %v486 = vunpack.c.l.b16 %v399
          %v487 = vunpack.c.l.b16 %v400
          %v488 = vunpack.c.l.b16 %v401
          %v489 = vpack.c.b16 %v458, %v457
          %v490 = vpack.c.b16 %v460, %v459
          %v491 = vpack.c.b16 %v462, %v461
          %v492 = vpack.c.b16 %v464, %v463
          %v493 = vpack.c.b16 %v466, %v465
          %v494 = vpack.c.b16 %v468, %v467
          %v495 = vpack.c.b16 %v470, %v469
          %v496 = vpack.c.b16 %v472, %v471
          %v497 = vpack.c.b16 %v474, %v473
          %v498 = vpack.c.b16 %v476, %v475
          %v499 = vpack.c.b16 %v478, %v477
          %v500 = vpack.c.b16 %v480, %v479
          %v501 = vpack.c.b16 %v482, %v481
          %v502 = vpack.c.b16 %v484, %v483
          %v503 = vpack.c.b16 %v486, %v485
          %v504 = vpack.c.b16 %v488, %v487
          %v537 = vunpack.c.l.b16 %v402
          %v538 = vunpack.c.l.b16 %v403
          %v539 = vunpack.c.l.b16 %v404
          %v540 = vunpack.c.l.b16 %v405
          %v541 = vunpack.c.l.b16 %v406
          %v542 = vunpack.c.l.b16 %v407
          %v543 = vunpack.c.l.b16 %v408
          %v544 = vunpack.c.l.b16 %v409
          %v545 = vunpack.c.l.b16 %v410
          %v546 = vunpack.c.l.b16 %v411
          %v547 = vunpack.c.l.b16 %v412
          %v548 = vunpack.c.l.b16 %v413
          %v549 = vunpack.c.l.b16 %v414
          %v550 = vunpack.c.l.b16 %v415
          %v551 = vunpack.c.l.b16 %v416
          %v552 = vunpack.c.l.b16 %v417
          %v553 = vpack.c.b16 %v538, %v537
          %v554 = vpack.c.b16 %v540, %v539
          %v555 = vpack.c.b16 %v542, %v541
          %v556 = vpack.c.b16 %v544, %v543
          %v557 = vpack.c.b16 %v546, %v545
          %v558 = vpack.c.b16 %v548, %v547
          %v559 = vpack.c.b16 %v550, %v549
          %v560 = vpack.c.b16 %v552, %v551
          %569 = vmatprep.subr.bf16.mxu0 0
          %570 = vmatpush1.bf16.msra.mxu0 %v553
          %571 = vmatprep.subr.bf16.mxu0 0
          %572 = vmatpush1.bf16.msra.mxu0 %v554
          %573 = vmatprep.subr.bf16.mxu0 0
          %574 = vmatpush1.bf16.msra.mxu0 %v555
          %575 = vmatprep.subr.bf16.mxu0 0
          %576 = vmatpush1.bf16.msra.mxu0 %v556
          %577 = vmatprep.subr.bf16.mxu0 0
          %578 = vmatpush1.bf16.msra.mxu0 %v557
          %579 = vmatprep.subr.bf16.mxu0 0
          %580 = vmatpush1.bf16.msra.mxu0 %v558
          %581 = vmatprep.subr.bf16.mxu0 0
          %582 = vmatpush1.bf16.msra.mxu0 %v559
          %583 = vmatprep.subr.bf16.mxu0 0
          %584 = vmatpush1.bf16.msra.mxu0 %v560
          %585 = vmatprep.subr.bf16.mxu0 0
          %586 = vmatpush1.bf16.msra.mxu0 0
          %587 = vmatprep.subr.bf16.mxu0 0
          %588 = vmatpush1.bf16.msra.mxu0 0
          %589 = vmatprep.subr.bf16.mxu0 0
          %590 = vmatpush1.bf16.msra.mxu0 0
          %591 = vmatprep.subr.bf16.mxu0 0
          %592 = vmatpush1.bf16.msra.mxu0 0
          %593 = vmatprep.subr.bf16.mxu0 0
          %594 = vmatpush1.bf16.msra.mxu0 0
          %595 = vmatprep.subr.bf16.mxu0 0
          %596 = vmatpush1.bf16.msra.mxu0 0
          %597 = vmatprep.subr.bf16.mxu0 0
          %598 = vmatpush1.bf16.msra.mxu0 0
          %599 = vmatprep.subr.bf16.mxu0 0
          %600 = vmatpush1.bf16.msra.mxu0 0
          %601 = vmatprep.mubr.bf16.mxu0 0
          %602 = vmatmul.mubr.bf16.gmra.mrb[0].mxu0 %v489
          %v603 = vpop.f32.mrb[0].mxu0
          %v604 = vadd.f32 %v423, %v603
          %v605 = vpop.f32.mrb[0].mxu0
          %v606 = vpop.f32.mrb[0].mxu0
          %v607 = vadd.f32 %v423, %v606
          %v608 = vpop.f32.mrb[0].mxu0
          %609 = vmatprep.mubr.bf16.mxu0 0
          %610 = vmatmul.mubr.bf16.gmra.mrb[0].mxu0 %v490
          %v611 = vpop.f32.mrb[0].mxu0
          %v612 = vadd.f32 %v423, %v611
          %v613 = vpop.f32.mrb[0].mxu0
          %v614 = vpop.f32.mrb[0].mxu0
          %v615 = vadd.f32 %v423, %v614
          %v616 = vpop.f32.mrb[0].mxu0
          %617 = vmatprep.mubr.bf16.mxu0 0
          %618 = vmatmul.mubr.bf16.gmra.mrb[0].mxu0 %v491
          %v619 = vpop.f32.mrb[0].mxu0
          %v620 = vadd.f32 %v423, %v619
          %v621 = vpop.f32.mrb[0].mxu0
          %v622 = vpop.f32.mrb[0].mxu0
          %v623 = vadd.f32 %v423, %v622
          %v624 = vpop.f32.mrb[0].mxu0
          %625 = vmatprep.mubr.bf16.mxu0 0
          %626 = vmatmul.mubr.bf16.gmra.mrb[0].mxu0 %v492
          %v627 = vpop.f32.mrb[0].mxu0
          %v628 = vadd.f32 %v423, %v627
          %v629 = vpop.f32.mrb[0].mxu0
          %v630 = vpop.f32.mrb[0].mxu0
          %v631 = vadd.f32 %v423, %v630
          %v632 = vpop.f32.mrb[0].mxu0
          %633 = vmatprep.mubr.bf16.mxu0 0
          %634 = vmatmul.mubr.bf16.gmra.mrb[0].mxu0 %v493
          %v635 = vpop.f32.mrb[0].mxu0
          %v636 = vadd.f32 %v423, %v635
          %v637 = vpop.f32.mrb[0].mxu0
          %v638 = vpop.f32.mrb[0].mxu0
          %v639 = vadd.f32 %v423, %v638
          %v640 = vpop.f32.mrb[0].mxu0
          %641 = vmatprep.mubr.bf16.mxu0 0
          %642 = vmatmul.mubr.bf16.gmra.mrb[0].mxu0 %v494
          %v643 = vpop.f32.mrb[0].mxu0
          %v644 = vadd.f32 %v423, %v643
          %v645 = vpop.f32.mrb[0].mxu0
          %v646 = vpop.f32.mrb[0].mxu0
          %v647 = vadd.f32 %v423, %v646
          %v648 = vpop.f32.mrb[0].mxu0
          %649 = vmatprep.mubr.bf16.mxu0 0
          %650 = vmatmul.mubr.bf16.gmra.mrb[0].mxu0 %v495
          %v651 = vpop.f32.mrb[0].mxu0
          %v652 = vadd.f32 %v423, %v651
          %v653 = vpop.f32.mrb[0].mxu0
          %v654 = vpop.f32.mrb[0].mxu0
          %v655 = vadd.f32 %v423, %v654
          %v656 = vpop.f32.mrb[0].mxu0
          %657 = vmatprep.mubr.bf16.mxu0 0
          %658 = vmatmul.mubr.bf16.gmra.mrb[0].mxu0 %v496
          %v659 = vpop.f32.mrb[0].mxu0
          %v660 = vadd.f32 %v423, %v659
          %v661 = vpop.f32.mrb[0].mxu0
          %v662 = vpop.f32.mrb[0].mxu0
          %v663 = vadd.f32 %v423, %v662
          %v664 = vpop.f32.mrb[0].mxu0
          %665 = vmatprep.mubr.bf16.mxu0 0
          %666 = vmatmul.mubr.bf16.gmra.mrb[0].mxu0 %v497
          %v667 = vpop.f32.mrb[0].mxu0
          %v668 = vadd.f32 %v423, %v667
          %v669 = vpop.f32.mrb[0].mxu0
          %v670 = vpop.f32.mrb[0].mxu0
          %v671 = vadd.f32 %v423, %v670
          %v672 = vpop.f32.mrb[0].mxu0
          %673 = vmatprep.mubr.bf16.mxu0 0
          %674 = vmatmul.mubr.bf16.gmra.mrb[0].mxu0 %v498
          %v675 = vpop.f32.mrb[0].mxu0
          %v676 = vadd.f32 %v423, %v675
          %v677 = vpop.f32.mrb[0].mxu0
          %v678 = vpop.f32.mrb[0].mxu0
          %v679 = vadd.f32 %v423, %v678
          %v680 = vpop.f32.mrb[0].mxu0
          %681 = vmatprep.mubr.bf16.mxu0 0
          %682 = vmatmul.mubr.bf16.gmra.mrb[0].mxu0 %v499
          %v683 = vpop.f32.mrb[0].mxu0
          %v684 = vadd.f32 %v423, %v683
          %v685 = vpop.f32.mrb[0].mxu0
          %v686 = vpop.f32.mrb[0].mxu0
          %v687 = vadd.f32 %v423, %v686
          %v688 = vpop.f32.mrb[0].mxu0
          %689 = vmatprep.mubr.bf16.mxu0 0
          %690 = vmatmul.mubr.bf16.gmra.mrb[0].mxu0 %v500
          %v691 = vpop.f32.mrb[0].mxu0
          %v692 = vadd.f32 %v423, %v691
          %v693 = vpop.f32.mrb[0].mxu0
          %v694 = vpop.f32.mrb[0].mxu0
          %v695 = vadd.f32 %v423, %v694
          %v696 = vpop.f32.mrb[0].mxu0
          %697 = vmatprep.mubr.bf16.mxu0 0
          %698 = vmatmul.mubr.bf16.gmra.mrb[0].mxu0 %v501
          %v699 = vpop.f32.mrb[0].mxu0
          %v700 = vadd.f32 %v423, %v699
          %v701 = vpop.f32.mrb[0].mxu0
          %v702 = vpop.f32.mrb[0].mxu0
          %v703 = vadd.f32 %v423, %v702
          %v704 = vpop.f32.mrb[0].mxu0
          %705 = vmatprep.mubr.bf16.mxu0 0
          %706 = vmatmul.mubr.bf16.gmra.mrb[0].mxu0 %v502
          %v707 = vpop.f32.mrb[0].mxu0
          %v708 = vadd.f32 %v423, %v707
          %v709 = vpop.f32.mrb[0].mxu0
          %v710 = vpop.f32.mrb[0].mxu0
          %v711 = vadd.f32 %v423, %v710
          %v712 = vpop.f32.mrb[0].mxu0
          %713 = vmatprep.mubr.bf16.mxu0 0
          %714 = vmatmul.mubr.bf16.gmra.mrb[0].mxu0 %v503
          %v715 = vpop.f32.mrb[0].mxu0
          %v716 = vadd.f32 %v423, %v715
          %v717 = vpop.f32.mrb[0].mxu0
          %v718 = vpop.f32.mrb[0].mxu0
          %v719 = vadd.f32 %v423, %v718
          %v720 = vpop.f32.mrb[0].mxu0
          %721 = vmatprep.mubr.bf16.mxu0 0
          %722 = vmatmul.mubr.bf16.gmra.mrb[0].mxu0 %v504
          %v723 = vpop.f32.mrb[0].mxu0
          %v724 = vadd.f32 %v423, %v723
          %v725 = vpop.f32.mrb[0].mxu0
          %v726 = vpop.f32.mrb[0].mxu0
          %v727 = vadd.f32 %v423, %v726
          %v728 = vpop.f32.mrb[0].mxu0
          %729 = vdwg.mxu0
          %v730 = vxor.u32 %v604, 2147483648
          %v731 = vxor.u32 %v607, 2147483648
          %v732 = vxor.u32 %v612, 2147483648
          %v733 = vxor.u32 %v615, 2147483648
          %v734 = vxor.u32 %v620, 2147483648
          %v735 = vxor.u32 %v623, 2147483648
          %v736 = vxor.u32 %v628, 2147483648
          %v737 = vxor.u32 %v631, 2147483648
          %v738 = vxor.u32 %v636, 2147483648
          %v739 = vxor.u32 %v639, 2147483648
          %v740 = vxor.u32 %v644, 2147483648
          %v741 = vxor.u32 %v647, 2147483648
          %v742 = vxor.u32 %v652, 2147483648
          %v743 = vxor.u32 %v655, 2147483648
          %v744 = vxor.u32 %v660, 2147483648
          %v745 = vxor.u32 %v663, 2147483648
          %v746 = vxor.u32 %v668, 2147483648
          %v747 = vxor.u32 %v671, 2147483648
          %v748 = vxor.u32 %v676, 2147483648
          %v749 = vxor.u32 %v679, 2147483648
          %v750 = vxor.u32 %v684, 2147483648
          %v751 = vxor.u32 %v687, 2147483648
          %v752 = vxor.u32 %v692, 2147483648
          %v753 = vxor.u32 %v695, 2147483648
          %v754 = vxor.u32 %v700, 2147483648
          %v755 = vxor.u32 %v703, 2147483648
          %v756 = vxor.u32 %v708, 2147483648
          %v757 = vxor.u32 %v711, 2147483648
          %v758 = vxor.u32 %v716, 2147483648
          %v759 = vxor.u32 %v719, 2147483648
          %v760 = vxor.u32 %v724, 2147483648
          %v761 = vxor.u32 %v727, 2147483648
          %v762 = vmul.f32 %v730, 1.442695
          %v763 = vpow.pop %v762
          %v764 = vmul.f32 %v731, 1.442695
          %v765 = vpow.pop %v764
          %v766 = vmul.f32 %v732, 1.442695
          %v767 = vpow.pop %v766
          %v768 = vmul.f32 %v733, 1.442695
          %v769 = vpow.pop %v768
          %v770 = vmul.f32 %v734, 1.442695
          %v771 = vpow.pop %v770
          %v772 = vmul.f32 %v735, 1.442695
          %v773 = vpow.pop %v772
          %v774 = vmul.f32 %v736, 1.442695
          %v775 = vpow.pop %v774
          %v776 = vmul.f32 %v737, 1.442695
          %v777 = vpow.pop %v776
          %v778 = vmul.f32 %v738, 1.442695
          %v779 = vpow.pop %v778
          %v780 = vmul.f32 %v739, 1.442695
          %v781 = vpow.pop %v780
          %v782 = vmul.f32 %v740, 1.442695
          %v783 = vpow.pop %v782
          %v784 = vmul.f32 %v741, 1.442695
          %v785 = vpow.pop %v784
          %v786 = vmul.f32 %v742, 1.442695
          %v787 = vpow.pop %v786
          %v788 = vmul.f32 %v743, 1.442695
          %v789 = vpow.pop %v788
          %v790 = vmul.f32 %v744, 1.442695
          %v791 = vpow.pop %v790
          %v792 = vmul.f32 %v745, 1.442695
          %v793 = vpow.pop %v792
          %v794 = vmul.f32 %v746, 1.442695
          %v795 = vpow.pop %v794
          %v796 = vmul.f32 %v747, 1.442695
          %v797 = vpow.pop %v796
          %v798 = vmul.f32 %v748, 1.442695
          %v799 = vpow.pop %v798
          %v800 = vmul.f32 %v749, 1.442695
          %v801 = vpow.pop %v800
          %v802 = vmul.f32 %v750, 1.442695
          %v803 = vpow.pop %v802
          %v804 = vmul.f32 %v751, 1.442695
          %v805 = vpow.pop %v804
          %v806 = vmul.f32 %v752, 1.442695
          %v807 = vpow.pop %v806
          %v808 = vmul.f32 %v753, 1.442695
          %v809 = vpow.pop %v808
          %v810 = vmul.f32 %v754, 1.442695
          %v811 = vpow.pop %v810
          %v812 = vmul.f32 %v755, 1.442695
          %v813 = vpow.pop %v812
          %v814 = vmul.f32 %v756, 1.442695
          %v815 = vpow.pop %v814
          %v816 = vmul.f32 %v757, 1.442695
          %v817 = vpow.pop %v816
          %v818 = vmul.f32 %v758, 1.442695
          %v819 = vpow.pop %v818
          %v820 = vmul.f32 %v759, 1.442695
          %v821 = vpow.pop %v820
          %v822 = vmul.f32 %v760, 1.442695
          %v823 = vpow.pop %v822
          %v824 = vmul.f32 %v761, 1.442695
          %v825 = vpow.pop %v824
          %v826 = vadd.f32 %v763, 1.0
          %v827 = vadd.f32 %v765, 1.0
          %v828 = vadd.f32 %v767, 1.0
          %v829 = vadd.f32 %v769, 1.0
          %v830 = vadd.f32 %v771, 1.0
          %v831 = vadd.f32 %v773, 1.0
          %v832 = vadd.f32 %v775, 1.0
          %v833 = vadd.f32 %v777, 1.0
          %v834 = vadd.f32 %v779, 1.0
          %v835 = vadd.f32 %v781, 1.0
          %v836 = vadd.f32 %v783, 1.0
          %v837 = vadd.f32 %v785, 1.0
          %v838 = vadd.f32 %v787, 1.0
          %v839 = vadd.f32 %v789, 1.0
          %v840 = vadd.f32 %v791, 1.0
          %v841 = vadd.f32 %v793, 1.0
          %v842 = vadd.f32 %v795, 1.0
          %v843 = vadd.f32 %v797, 1.0
          %v844 = vadd.f32 %v799, 1.0
          %v845 = vadd.f32 %v801, 1.0
          %v846 = vadd.f32 %v803, 1.0
          %v847 = vadd.f32 %v805, 1.0
          %v848 = vadd.f32 %v807, 1.0
          %v849 = vadd.f32 %v809, 1.0
          %v850 = vadd.f32 %v811, 1.0
          %v851 = vadd.f32 %v813, 1.0
          %v852 = vadd.f32 %v815, 1.0
          %v853 = vadd.f32 %v817, 1.0
          %v854 = vadd.f32 %v819, 1.0
          %v855 = vadd.f32 %v821, 1.0
          %v856 = vadd.f32 %v823, 1.0
          %v857 = vadd.f32 %v825, 1.0
          %v858 = vrcp.pop %v826
          %v859 = vmul.f32 1.0, %v858
          %v860 = vrcp.pop %v827
          %v861 = vmul.f32 1.0, %v860
          %v862 = vrcp.pop %v828
          %v863 = vmul.f32 1.0, %v862
          %v864 = vrcp.pop %v829
          %v865 = vmul.f32 1.0, %v864
          %v866 = vrcp.pop %v830
          %v867 = vmul.f32 1.0, %v866
          %v868 = vrcp.pop %v831
          %v869 = vmul.f32 1.0, %v868
          %v870 = vrcp.pop %v832
          %v871 = vmul.f32 1.0, %v870
          %v872 = vrcp.pop %v833
          %v873 = vmul.f32 1.0, %v872
          %v874 = vrcp.pop %v834
          %v875 = vmul.f32 1.0, %v874
          %v876 = vrcp.pop %v835
          %v877 = vmul.f32 1.0, %v876
          %v878 = vrcp.pop %v836
          %v879 = vmul.f32 1.0, %v878
          %v880 = vrcp.pop %v837
          %v881 = vmul.f32 1.0, %v880
          %v882 = vrcp.pop %v838
          %v883 = vmul.f32 1.0, %v882
          %v884 = vrcp.pop %v839
          %v885 = vmul.f32 1.0, %v884
          %v886 = vrcp.pop %v840
          %v887 = vmul.f32 1.0, %v886
          %v888 = vrcp.pop %v841
          %v889 = vmul.f32 1.0, %v888
          %v890 = vrcp.pop %v842
          %v891 = vmul.f32 1.0, %v890
          %v892 = vrcp.pop %v843
          %v893 = vmul.f32 1.0, %v892
          %v894 = vrcp.pop %v844
          %v895 = vmul.f32 1.0, %v894
          %v896 = vrcp.pop %v845
          %v897 = vmul.f32 1.0, %v896
          %v898 = vrcp.pop %v846
          %v899 = vmul.f32 1.0, %v898
          %v900 = vrcp.pop %v847
          %v901 = vmul.f32 1.0, %v900
          %v902 = vrcp.pop %v848
          %v903 = vmul.f32 1.0, %v902
          %v904 = vrcp.pop %v849
          %v905 = vmul.f32 1.0, %v904
          %v906 = vrcp.pop %v850
          %v907 = vmul.f32 1.0, %v906
          %v908 = vrcp.pop %v851
          %v909 = vmul.f32 1.0, %v908
          %v910 = vrcp.pop %v852
          %v911 = vmul.f32 1.0, %v910
          %v912 = vrcp.pop %v853
          %v913 = vmul.f32 1.0, %v912
          %v914 = vrcp.pop %v854
          %v915 = vmul.f32 1.0, %v914
          %v916 = vrcp.pop %v855
          %v917 = vmul.f32 1.0, %v916
          %v918 = vrcp.pop %v856
          %v919 = vmul.f32 1.0, %v918
          %v920 = vrcp.pop %v857
          %v921 = vmul.f32 1.0, %v920
          %s922 = smul.u32 %s30, 256
          %v923 = vpack.c.bf16 %v861, %v859
          %v924 = vpack.c.bf16 %v865, %v863
          %v925 = vpack.c.bf16 %v869, %v867
          %v926 = vpack.c.bf16 %v873, %v871
          %v927 = vpack.c.bf16 %v877, %v875
          %v928 = vpack.c.bf16 %v881, %v879
          %v929 = vpack.c.bf16 %v885, %v883
          %v930 = vpack.c.bf16 %v889, %v887
          %v931 = vpack.c.bf16 %v893, %v891
          %v932 = vpack.c.bf16 %v897, %v895
          %v933 = vpack.c.bf16 %v901, %v899
          %v934 = vpack.c.bf16 %v905, %v903
          %v935 = vpack.c.bf16 %v909, %v907
          %v936 = vpack.c.bf16 %v913, %v911
          %v937 = vpack.c.bf16 %v917, %v915
          %v938 = vpack.c.bf16 %v921, %v919
          %s939 = sshra.s32 %s922, 4
          %s940 = sand.u32 %s922, 15
          %s941 = smul.addr %s939, 8
          %s942 = scalar_lea.vmem [#allocation3], %s941
          %943 = vst [vmem:[%s942] sm:$0xff] %v923
          %944 = vst [vmem:[%s942 + $0x8] sm:$0xff] %v924
          %945 = vst [vmem:[%s942 + $0x10] sm:$0xff] %v925
          %946 = vst [vmem:[%s942 + $0x18] sm:$0xff] %v926
          %947 = vst [vmem:[%s942 + $0x20] sm:$0xff] %v927
          %948 = vst [vmem:[%s942 + $0x28] sm:$0xff] %v928
          %949 = vst [vmem:[%s942 + $0x30] sm:$0xff] %v929
          %950 = vst [vmem:[%s942 + $0x38] sm:$0xff] %v930
          %951 = vst [vmem:[%s942 + $0x40] sm:$0xff] %v931
          %952 = vst [vmem:[%s942 + $0x48] sm:$0xff] %v932
          %953 = vst [vmem:[%s942 + $0x50] sm:$0xff] %v933
          %954 = vst [vmem:[%s942 + $0x58] sm:$0xff] %v934
          %955 = vst [vmem:[%s942 + $0x60] sm:$0xff] %v935
          %956 = vst [vmem:[%s942 + $0x68] sm:$0xff] %v936
          %957 = vst [vmem:[%s942 + $0x70] sm:$0xff] %v937
          %958 = vst [vmem:[%s942 + $0x78] sm:$0xff] %v938
          %s959 = smul.addr %s939, 8
          %s960 = scalar_lea.vmem [#allocation4], %s959
          %961 = vst [vmem:[%s960] sm:$0xff] %v923
          %962 = vst [vmem:[%s960 + $0x8] sm:$0xff] %v924
          %963 = vst [vmem:[%s960 + $0x10] sm:$0xff] %v925
          %964 = vst [vmem:[%s960 + $0x18] sm:$0xff] %v926
          %965 = vst [vmem:[%s960 + $0x20] sm:$0xff] %v927
          %966 = vst [vmem:[%s960 + $0x28] sm:$0xff] %v928
          %967 = vst [vmem:[%s960 + $0x30] sm:$0xff] %v929
          %968 = vst [vmem:[%s960 + $0x38] sm:$0xff] %v930
          %969 = vst [vmem:[%s960 + $0x40] sm:$0xff] %v931
          %970 = vst [vmem:[%s960 + $0x48] sm:$0xff] %v932
          %971 = vst [vmem:[%s960 + $0x50] sm:$0xff] %v933
          %972 = vst [vmem:[%s960 + $0x58] sm:$0xff] %v934
          %973 = vst [vmem:[%s960 + $0x60] sm:$0xff] %v935
          %974 = vst [vmem:[%s960 + $0x68] sm:$0xff] %v936
          %975 = vst [vmem:[%s960 + $0x70] sm:$0xff] %v937
          %976 = vst [vmem:[%s960 + $0x78] sm:$0xff] %v938
        $region64: #{tpu_custom_call.1} parent=43 // pred_fallthru
          _
        %p977 = scmp.lt.s32.totalorder %s28, 0
        %s978 = ssub.s32 0, %s28
        %s979 = scalar_select %p977, %s978, %s28
        %s980 = sand.u32 %s979, 1
        %s981 = ssub.s32 0, %s980
        %s982 = scalar_select %p977, %s981, %s980
        %p983 = scmp.ne.s32.totalorder %s982, 0
        %p984 = scmp.lt.s32.totalorder %s982, 0
        %p985 = pnand %p984, %p983
        %p986 = pneg %p985
        %s987 = sadd.s32 %s982, 2
        %s988 = scalar_select %p986, %s987, %s982
        %s989 = smul.u32 %s988, 256
        %s990 = smul.u32 %s30, 256
        %s991 = sadd.s32 %s989, %s990
        %v992 = vld [vmem:[#allocation8] sm:$0xff]
        %v993 = vld [vmem:[#allocation8 + $0x8] sm:$0xff]
        %v994 = vld [vmem:[#allocation8 + $0x10] sm:$0xff]
        %v995 = vld [vmem:[#allocation8 + $0x18] sm:$0xff]
        %v996 = vld [vmem:[#allocation8 + $0x20] sm:$0xff]
        %v997 = vld [vmem:[#allocation8 + $0x28] sm:$0xff]
        %v998 = vld [vmem:[#allocation8 + $0x30] sm:$0xff]
        %v999 = vld [vmem:[#allocation8 + $0x38] sm:$0xff]
        %v1000 = vld [vmem:[#allocation8 + $0x40] sm:$0xff]
        %v1001 = vld [vmem:[#allocation8 + $0x48] sm:$0xff]
        %v1002 = vld [vmem:[#allocation8 + $0x50] sm:$0xff]
        %v1003 = vld [vmem:[#allocation8 + $0x58] sm:$0xff]
        %v1004 = vld [vmem:[#allocation8 + $0x60] sm:$0xff]
        %v1005 = vld [vmem:[#allocation8 + $0x68] sm:$0xff]
        %v1006 = vld [vmem:[#allocation8 + $0x70] sm:$0xff]
        %v1007 = vld [vmem:[#allocation8 + $0x78] sm:$0xff]
        %v1008 = vld [vmem:[#allocation8 + $0x80] sm:$0xff]
        %v1009 = vld [vmem:[#allocation8 + $0x88] sm:$0xff]
        %v1010 = vld [vmem:[#allocation8 + $0x90] sm:$0xff]
        %v1011 = vld [vmem:[#allocation8 + $0x98] sm:$0xff]
        %v1012 = vld [vmem:[#allocation8 + $0xa0] sm:$0xff]
        %v1013 = vld [vmem:[#allocation8 + $0xa8] sm:$0xff]
        %v1014 = vld [vmem:[#allocation8 + $0xb0] sm:$0xff]
        %v1015 = vld [vmem:[#allocation8 + $0xb8] sm:$0xff]
        %v1016 = vld [vmem:[#allocation8 + $0xc0] sm:$0xff]
        %v1017 = vld [vmem:[#allocation8 + $0xc8] sm:$0xff]
        %v1018 = vld [vmem:[#allocation8 + $0xd0] sm:$0xff]
        %v1019 = vld [vmem:[#allocation8 + $0xd8] sm:$0xff]
        %v1020 = vld [vmem:[#allocation8 + $0xe0] sm:$0xff]
        %v1021 = vld [vmem:[#allocation8 + $0xe8] sm:$0xff]
        %v1022 = vld [vmem:[#allocation8 + $0xf0] sm:$0xff]
        %v1023 = vld [vmem:[#allocation8 + $0xf8] sm:$0xff]
        %s1024 = sshra.s32 %s991, 4
        %s1025 = sand.u32 %s991, 15
        %s1026 = smul.addr %s1024, 8
        %s1027 = scalar_lea.vmem [#allocation4], %s1026
        %v1028 = vld [vmem:[%s1027] sm:$0xff]
        %v1029 = vld [vmem:[%s1027 + $0x8] sm:$0xff]
        %v1030 = vld [vmem:[%s1027 + $0x10] sm:$0xff]
        %v1031 = vld [vmem:[%s1027 + $0x18] sm:$0xff]
        %v1032 = vld [vmem:[%s1027 + $0x20] sm:$0xff]
        %v1033 = vld [vmem:[%s1027 + $0x28] sm:$0xff]
        %v1034 = vld [vmem:[%s1027 + $0x30] sm:$0xff]
        %v1035 = vld [vmem:[%s1027 + $0x38] sm:$0xff]
        %v1036 = vld [vmem:[%s1027 + $0x40] sm:$0xff]
        %v1037 = vld [vmem:[%s1027 + $0x48] sm:$0xff]
        %v1038 = vld [vmem:[%s1027 + $0x50] sm:$0xff]
        %v1039 = vld [vmem:[%s1027 + $0x58] sm:$0xff]
        %v1040 = vld [vmem:[%s1027 + $0x60] sm:$0xff]
        %v1041 = vld [vmem:[%s1027 + $0x68] sm:$0xff]
        %v1042 = vld [vmem:[%s1027 + $0x70] sm:$0xff]
        %v1043 = vld [vmem:[%s1027 + $0x78] sm:$0xff]
        %v1076 = vunpack.c.l.b16 %v992
        %v1077 = vunpack.c.h.b16 %v992
        %v1078 = vunpack.c.l.b16 %v993
        %v1079 = vunpack.c.h.b16 %v993
        %v1080 = vunpack.c.l.b16 %v994
        %v1081 = vunpack.c.h.b16 %v994
        %v1082 = vunpack.c.l.b16 %v995
        %v1083 = vunpack.c.h.b16 %v995
        %v1084 = vunpack.c.l.b16 %v996
        %v1085 = vunpack.c.h.b16 %v996
        %v1086 = vunpack.c.l.b16 %v997
        %v1087 = vunpack.c.h.b16 %v997
        %v1088 = vunpack.c.l.b16 %v998
        %v1089 = vunpack.c.h.b16 %v998
        %v1090 = vunpack.c.l.b16 %v999
        %v1091 = vunpack.c.h.b16 %v999
        %v1092 = vunpack.c.l.b16 %v1000
        %v1093 = vunpack.c.h.b16 %v1000
        %v1094 = vunpack.c.l.b16 %v1001
        %v1095 = vunpack.c.h.b16 %v1001
        %v1096 = vunpack.c.l.b16 %v1002
        %v1097 = vunpack.c.h.b16 %v1002
        %v1098 = vunpack.c.l.b16 %v1003
        %v1099 = vunpack.c.h.b16 %v1003
        %v1100 = vunpack.c.l.b16 %v1004
        %v1101 = vunpack.c.h.b16 %v1004
        %v1102 = vunpack.c.l.b16 %v1005
        %v1103 = vunpack.c.h.b16 %v1005
        %v1104 = vunpack.c.l.b16 %v1006
        %v1105 = vunpack.c.h.b16 %v1006
        %v1106 = vunpack.c.l.b16 %v1007
        %v1107 = vunpack.c.h.b16 %v1007
        %v1108 = vunpack.c.l.b16 %v1008
        %v1109 = vunpack.c.h.b16 %v1008
        %v1110 = vunpack.c.l.b16 %v1009
        %v1111 = vunpack.c.h.b16 %v1009
        %v1112 = vunpack.c.l.b16 %v1010
        %v1113 = vunpack.c.h.b16 %v1010
        %v1114 = vunpack.c.l.b16 %v1011
        %v1115 = vunpack.c.h.b16 %v1011
        %v1116 = vunpack.c.l.b16 %v1012
        %v1117 = vunpack.c.h.b16 %v1012
        %v1118 = vunpack.c.l.b16 %v1013
        %v1119 = vunpack.c.h.b16 %v1013
        %v1120 = vunpack.c.l.b16 %v1014
        %v1121 = vunpack.c.h.b16 %v1014
        %v1122 = vunpack.c.l.b16 %v1015
        %v1123 = vunpack.c.h.b16 %v1015
        %v1124 = vunpack.c.l.b16 %v1016
        %v1125 = vunpack.c.h.b16 %v1016
        %v1126 = vunpack.c.l.b16 %v1017
        %v1127 = vunpack.c.h.b16 %v1017
        %v1128 = vunpack.c.l.b16 %v1018
        %v1129 = vunpack.c.h.b16 %v1018
        %v1130 = vunpack.c.l.b16 %v1019
        %v1131 = vunpack.c.h.b16 %v1019
        %v1132 = vunpack.c.l.b16 %v1020
        %v1133 = vunpack.c.h.b16 %v1020
        %v1134 = vunpack.c.l.b16 %v1021
        %v1135 = vunpack.c.h.b16 %v1021
        %v1136 = vunpack.c.l.b16 %v1022
        %v1137 = vunpack.c.h.b16 %v1022
        %v1138 = vunpack.c.l.b16 %v1023
        %v1139 = vunpack.c.h.b16 %v1023
        %v1140 = vpack.c.b16 %v1078, %v1076
        %v1141 = vpack.c.b16 %v1079, %v1077
        %v1142 = vpack.c.b16 %v1082, %v1080
        %v1143 = vpack.c.b16 %v1083, %v1081
        %v1144 = vpack.c.b16 %v1086, %v1084
        %v1145 = vpack.c.b16 %v1087, %v1085
        %v1146 = vpack.c.b16 %v1090, %v1088
        %v1147 = vpack.c.b16 %v1091, %v1089
        %v1148 = vpack.c.b16 %v1094, %v1092
        %v1149 = vpack.c.b16 %v1095, %v1093
        %v1150 = vpack.c.b16 %v1098, %v1096
        %v1151 = vpack.c.b16 %v1099, %v1097
        %v1152 = vpack.c.b16 %v1102, %v1100
        %v1153 = vpack.c.b16 %v1103, %v1101
        %v1154 = vpack.c.b16 %v1106, %v1104
        %v1155 = vpack.c.b16 %v1107, %v1105
        %v1156 = vpack.c.b16 %v1110, %v1108
        %v1157 = vpack.c.b16 %v1111, %v1109
        %v1158 = vpack.c.b16 %v1114, %v1112
        %v1159 = vpack.c.b16 %v1115, %v1113
        %v1160 = vpack.c.b16 %v1118, %v1116
        %v1161 = vpack.c.b16 %v1119, %v1117
        %v1162 = vpack.c.b16 %v1122, %v1120
        %v1163 = vpack.c.b16 %v1123, %v1121
        %v1164 = vpack.c.b16 %v1126, %v1124
        %v1165 = vpack.c.b16 %v1127, %v1125
        %v1166 = vpack.c.b16 %v1130, %v1128
        %v1167 = vpack.c.b16 %v1131, %v1129
        %v1168 = vpack.c.b16 %v1134, %v1132
        %v1169 = vpack.c.b16 %v1135, %v1133
        %v1170 = vpack.c.b16 %v1138, %v1136
        %v1171 = vpack.c.b16 %v1139, %v1137
        %1204 = vmatprep.subr.bf16.mxu0 0
        %1205 = vmatpush1.bf16.msra.mxu0 %v1028
        %1206 = vmatprep.subr.bf16.mxu0 0
        %1207 = vmatpush1.bf16.msra.mxu0 %v1029
        %1208 = vmatprep.subr.bf16.mxu0 0
        %1209 = vmatpush1.bf16.msra.mxu0 %v1030
        %1210 = vmatprep.subr.bf16.mxu0 0
        %1211 = vmatpush1.bf16.msra.mxu0 %v1031
        %1212 = vmatprep.subr.bf16.mxu0 0
        %1213 = vmatpush1.bf16.msra.mxu0 %v1032
        %1214 = vmatprep.subr.bf16.mxu0 0
        %1215 = vmatpush1.bf16.msra.mxu0 %v1033
        %1216 = vmatprep.subr.bf16.mxu0 0
        %1217 = vmatpush1.bf16.msra.mxu0 %v1034
        %1218 = vmatprep.subr.bf16.mxu0 0
        %1219 = vmatpush1.bf16.msra.mxu0 %v1035
        %1220 = vmatprep.subr.bf16.mxu0 0
        %1221 = vmatpush1.bf16.msra.mxu0 %v1036
        %1222 = vmatprep.subr.bf16.mxu0 0
        %1223 = vmatpush1.bf16.msra.mxu0 %v1037
        %1224 = vmatprep.subr.bf16.mxu0 0
        %1225 = vmatpush1.bf16.msra.mxu0 %v1038
        %1226 = vmatprep.subr.bf16.mxu0 0
        %1227 = vmatpush1.bf16.msra.mxu0 %v1039
        %1228 = vmatprep.subr.bf16.mxu0 0
        %1229 = vmatpush1.bf16.msra.mxu0 %v1040
        %1230 = vmatprep.subr.bf16.mxu0 0
        %1231 = vmatpush1.bf16.msra.mxu0 %v1041
        %1232 = vmatprep.subr.bf16.mxu0 0
        %1233 = vmatpush1.bf16.msra.mxu0 %v1042
        %1234 = vmatprep.subr.bf16.mxu0 0
        %1235 = vmatpush1.bf16.msra.mxu0 %v1043
        %1236 = vmatprep.mubr.bf16.mxu0 %v1141
        %1237 = vmatmul.mubr.bf16.gmra.mrb[0].mxu0 %v1140
        %v1238 = vpop.f32.mrb[0].mxu0
        %v1239 = vadd.f32 0.0, %v1238
        %v1240 = vpop.f32.mrb[0].mxu0
        %v1241 = vpop.f32.mrb[0].mxu0
        %v1242 = vadd.f32 0.0, %v1241
        %v1243 = vpop.f32.mrb[0].mxu0
        %1244 = vmatprep.mubr.bf16.mxu0 %v1143
        %1245 = vmatmul.mubr.bf16.gmra.mrb[0].mxu0 %v1142
        %v1246 = vpop.f32.mrb[0].mxu0
        %v1247 = vadd.f32 0.0, %v1246
        %v1248 = vpop.f32.mrb[0].mxu0
        %v1249 = vpop.f32.mrb[0].mxu0
        %v1250 = vadd.f32 0.0, %v1249
        %v1251 = vpop.f32.mrb[0].mxu0
        %1252 = vmatprep.mubr.bf16.mxu0 %v1145
        %1253 = vmatmul.mubr.bf16.gmra.mrb[0].mxu0 %v1144
        %v1254 = vpop.f32.mrb[0].mxu0
        %v1255 = vadd.f32 0.0, %v1254
        %v1256 = vpop.f32.mrb[0].mxu0
        %v1257 = vpop.f32.mrb[0].mxu0
        %v1258 = vadd.f32 0.0, %v1257
        %v1259 = vpop.f32.mrb[0].mxu0
        %1260 = vmatprep.mubr.bf16.mxu0 %v1147
        %1261 = vmatmul.mubr.bf16.gmra.mrb[0].mxu0 %v1146
        %v1262 = vpop.f32.mrb[0].mxu0
        %v1263 = vadd.f32 0.0, %v1262
        %v1264 = vpop.f32.mrb[0].mxu0
        %v1265 = vpop.f32.mrb[0].mxu0
        %v1266 = vadd.f32 0.0, %v1265
        %v1267 = vpop.f32.mrb[0].mxu0
        %1268 = vmatprep.mubr.bf16.mxu0 %v1149
        %1269 = vmatmul.mubr.bf16.gmra.mrb[0].mxu0 %v1148
        %v1270 = vpop.f32.mrb[0].mxu0
        %v1271 = vadd.f32 0.0, %v1270
        %v1272 = vpop.f32.mrb[0].mxu0
        %v1273 = vpop.f32.mrb[0].mxu0
        %v1274 = vadd.f32 0.0, %v1273
        %v1275 = vpop.f32.mrb[0].mxu0
        %1276 = vmatprep.mubr.bf16.mxu0 %v1151
        %1277 = vmatmul.mubr.bf16.gmra.mrb[0].mxu0 %v1150
        %v1278 = vpop.f32.mrb[0].mxu0
        %v1279 = vadd.f32 0.0, %v1278
        %v1280 = vpop.f32.mrb[0].mxu0
        %v1281 = vpop.f32.mrb[0].mxu0
        %v1282 = vadd.f32 0.0, %v1281
        %v1283 = vpop.f32.mrb[0].mxu0
        %1284 = vmatprep.mubr.bf16.mxu0 %v1153
        %1285 = vmatmul.mubr.bf16.gmra.mrb[0].mxu0 %v1152
        %v1286 = vpop.f32.mrb[0].mxu0
        %v1287 = vadd.f32 0.0, %v1286
        %v1288 = vpop.f32.mrb[0].mxu0
        %v1289 = vpop.f32.mrb[0].mxu0
        %v1290 = vadd.f32 0.0, %v1289
        %v1291 = vpop.f32.mrb[0].mxu0
        %1292 = vmatprep.mubr.bf16.mxu0 %v1155
        %1293 = vmatmul.mubr.bf16.gmra.mrb[0].mxu0 %v1154
        %v1294 = vpop.f32.mrb[0].mxu0
        %v1295 = vadd.f32 0.0, %v1294
        %v1296 = vpop.f32.mrb[0].mxu0
        %v1297 = vpop.f32.mrb[0].mxu0
        %v1298 = vadd.f32 0.0, %v1297
        %v1299 = vpop.f32.mrb[0].mxu0
        %1300 = vmatprep.mubr.bf16.mxu0 %v1157
        %1301 = vmatmul.mubr.bf16.gmra.mrb[0].mxu0 %v1156
        %v1302 = vpop.f32.mrb[0].mxu0
        %v1303 = vadd.f32 0.0, %v1302
        %v1304 = vpop.f32.mrb[0].mxu0
        %v1305 = vpop.f32.mrb[0].mxu0
        %v1306 = vadd.f32 0.0, %v1305
        %v1307 = vpop.f32.mrb[0].mxu0
        %1308 = vmatprep.mubr.bf16.mxu0 %v1159
        %1309 = vmatmul.mubr.bf16.gmra.mrb[0].mxu0 %v1158
        %v1310 = vpop.f32.mrb[0].mxu0
        %v1311 = vadd.f32 0.0, %v1310
        %v1312 = vpop.f32.mrb[0].mxu0
        %v1313 = vpop.f32.mrb[0].mxu0
        %v1314 = vadd.f32 0.0, %v1313
        %v1315 = vpop.f32.mrb[0].mxu0
        %1316 = vmatprep.mubr.bf16.mxu0 %v1161
        %1317 = vmatmul.mubr.bf16.gmra.mrb[0].mxu0 %v1160
        %v1318 = vpop.f32.mrb[0].mxu0
        %v1319 = vadd.f32 0.0, %v1318
        %v1320 = vpop.f32.mrb[0].mxu0
        %v1321 = vpop.f32.mrb[0].mxu0
        %v1322 = vadd.f32 0.0, %v1321
        %v1323 = vpop.f32.mrb[0].mxu0
        %1324 = vmatprep.mubr.bf16.mxu0 %v1163
        %1325 = vmatmul.mubr.bf16.gmra.mrb[0].mxu0 %v1162
        %v1326 = vpop.f32.mrb[0].mxu0
        %v1327 = vadd.f32 0.0, %v1326
        %v1328 = vpop.f32.mrb[0].mxu0
        %v1329 = vpop.f32.mrb[0].mxu0
        %v1330 = vadd.f32 0.0, %v1329
        %v1331 = vpop.f32.mrb[0].mxu0
        %1332 = vmatprep.mubr.bf16.mxu0 %v1165
        %1333 = vmatmul.mubr.bf16.gmra.mrb[0].mxu0 %v1164
        %v1334 = vpop.f32.mrb[0].mxu0
        %v1335 = vadd.f32 0.0, %v1334
        %v1336 = vpop.f32.mrb[0].mxu0
        %v1337 = vpop.f32.mrb[0].mxu0
        %v1338 = vadd.f32 0.0, %v1337
        %v1339 = vpop.f32.mrb[0].mxu0
        %1340 = vmatprep.mubr.bf16.mxu0 %v1167
        %1341 = vmatmul.mubr.bf16.gmra.mrb[0].mxu0 %v1166
        %v1342 = vpop.f32.mrb[0].mxu0
        %v1343 = vadd.f32 0.0, %v1342
        %v1344 = vpop.f32.mrb[0].mxu0
        %v1345 = vpop.f32.mrb[0].mxu0
        %v1346 = vadd.f32 0.0, %v1345
        %v1347 = vpop.f32.mrb[0].mxu0
        %1348 = vmatprep.mubr.bf16.mxu0 %v1169
        %1349 = vmatmul.mubr.bf16.gmra.mrb[0].mxu0 %v1168
        %v1350 = vpop.f32.mrb[0].mxu0
        %v1351 = vadd.f32 0.0, %v1350
        %v1352 = vpop.f32.mrb[0].mxu0
        %v1353 = vpop.f32.mrb[0].mxu0
        %v1354 = vadd.f32 0.0, %v1353
        %v1355 = vpop.f32.mrb[0].mxu0
        %1356 = vmatprep.mubr.bf16.mxu0 %v1171
        %1357 = vmatmul.mubr.bf16.gmra.mrb[0].mxu0 %v1170
        %v1358 = vpop.f32.mrb[0].mxu0
        %v1359 = vadd.f32 0.0, %v1358
        %v1360 = vpop.f32.mrb[0].mxu0
        %v1361 = vpop.f32.mrb[0].mxu0
        %v1362 = vadd.f32 0.0, %v1361
        %v1363 = vpop.f32.mrb[0].mxu0
        %1364 = vdwg.mxu0
        %p1365 = scmp.eq.s32.totalorder %s30, 0
        // Predicated region
        $region65: #{tpu_custom_call.1} parent=43 // pred_check
          %p1366 = pneg %p1365
        $region66: #{tpu_custom_call.1} parent=43 // pred_check_branch
          %1368 = sbr.rel (%p1366) target = $region68
        $region67: #{tpu_custom_call.1} parent=43 // pred_region
          %1369 = vst [vmem:[#allocation2] sm:$0xff] %v1239
          %1370 = vst [vmem:[#allocation2 + $0x8] sm:$0xff] %v1242
          %1371 = vst [vmem:[#allocation2 + $0x10] sm:$0xff] %v1247
          %1372 = vst [vmem:[#allocation2 + $0x18] sm:$0xff] %v1250
          %1373 = vst [vmem:[#allocation2 + $0x20] sm:$0xff] %v1255
          %1374 = vst [vmem:[#allocation2 + $0x28] sm:$0xff] %v1258
          %1375 = vst [vmem:[#allocation2 + $0x30] sm:$0xff] %v1263
          %1376 = vst [vmem:[#allocation2 + $0x38] sm:$0xff] %v1266
          %1377 = vst [vmem:[#allocation2 + $0x40] sm:$0xff] %v1271
          %1378 = vst [vmem:[#allocation2 + $0x48] sm:$0xff] %v1274
          %1379 = vst [vmem:[#allocation2 + $0x50] sm:$0xff] %v1279
          %1380 = vst [vmem:[#allocation2 + $0x58] sm:$0xff] %v1282
          %1381 = vst [vmem:[#allocation2 + $0x60] sm:$0xff] %v1287
          %1382 = vst [vmem:[#allocation2 + $0x68] sm:$0xff] %v1290
          %1383 = vst [vmem:[#allocation2 + $0x70] sm:$0xff] %v1295
          %1384 = vst [vmem:[#allocation2 + $0x78] sm:$0xff] %v1298
          %1385 = vst [vmem:[#allocation2 + $0x80] sm:$0xff] %v1303
          %1386 = vst [vmem:[#allocation2 + $0x88] sm:$0xff] %v1306
          %1387 = vst [vmem:[#allocation2 + $0x90] sm:$0xff] %v1311
          %1388 = vst [vmem:[#allocation2 + $0x98] sm:$0xff] %v1314
          %1389 = vst [vmem:[#allocation2 + $0xa0] sm:$0xff] %v1319
          %1390 = vst [vmem:[#allocation2 + $0xa8] sm:$0xff] %v1322
          %1391 = vst [vmem:[#allocation2 + $0xb0] sm:$0xff] %v1327
          %1392 = vst [vmem:[#allocation2 + $0xb8] sm:$0xff] %v1330
          %1393 = vst [vmem:[#allocation2 + $0xc0] sm:$0xff] %v1335
          %1394 = vst [vmem:[#allocation2 + $0xc8] sm:$0xff] %v1338
          %1395 = vst [vmem:[#allocation2 + $0xd0] sm:$0xff] %v1343
          %1396 = vst [vmem:[#allocation2 + $0xd8] sm:$0xff] %v1346
          %1397 = vst [vmem:[#allocation2 + $0xe0] sm:$0xff] %v1351
          %1398 = vst [vmem:[#allocation2 + $0xe8] sm:$0xff] %v1354
          %1399 = vst [vmem:[#allocation2 + $0xf0] sm:$0xff] %v1359
          %1400 = vst [vmem:[#allocation2 + $0xf8] sm:$0xff] %v1362
        $region68: #{tpu_custom_call.1} parent=43 // pred_fallthru
          _
        %p1401 = scmp.ne.s32.totalorder %s30, 0
        // Predicated region
        $region69: #{tpu_custom_call.1} parent=43 // pred_check
          %p1402 = pneg %p1401
        $region70: #{tpu_custom_call.1} parent=43 // pred_check_branch
          %1404 = sbr.rel (%p1402) target = $region72
        $region71: #{tpu_custom_call.1} parent=43 // pred_region
          %v1405 = vld [vmem:[#allocation2] sm:$0xff]
          %v1406 = vld [vmem:[#allocation2 + $0x8] sm:$0xff]
          %v1407 = vld [vmem:[#allocation2 + $0x10] sm:$0xff]
          %v1408 = vld [vmem:[#allocation2 + $0x18] sm:$0xff]
          %v1409 = vld [vmem:[#allocation2 + $0x20] sm:$0xff]
          %v1410 = vld [vmem:[#allocation2 + $0x28] sm:$0xff]
          %v1411 = vld [vmem:[#allocation2 + $0x30] sm:$0xff]
          %v1412 = vld [vmem:[#allocation2 + $0x38] sm:$0xff]
          %v1413 = vld [vmem:[#allocation2 + $0x40] sm:$0xff]
          %v1414 = vld [vmem:[#allocation2 + $0x48] sm:$0xff]
          %v1415 = vld [vmem:[#allocation2 + $0x50] sm:$0xff]
          %v1416 = vld [vmem:[#allocation2 + $0x58] sm:$0xff]
          %v1417 = vld [vmem:[#allocation2 + $0x60] sm:$0xff]
          %v1418 = vld [vmem:[#allocation2 + $0x68] sm:$0xff]
          %v1419 = vld [vmem:[#allocation2 + $0x70] sm:$0xff]
          %v1420 = vld [vmem:[#allocation2 + $0x78] sm:$0xff]
          %v1421 = vld [vmem:[#allocation2 + $0x80] sm:$0xff]
          %v1422 = vld [vmem:[#allocation2 + $0x88] sm:$0xff]
          %v1423 = vld [vmem:[#allocation2 + $0x90] sm:$0xff]
          %v1424 = vld [vmem:[#allocation2 + $0x98] sm:$0xff]
          %v1425 = vld [vmem:[#allocation2 + $0xa0] sm:$0xff]
          %v1426 = vld [vmem:[#allocation2 + $0xa8] sm:$0xff]
          %v1427 = vld [vmem:[#allocation2 + $0xb0] sm:$0xff]
          %v1428 = vld [vmem:[#allocation2 + $0xb8] sm:$0xff]
          %v1429 = vld [vmem:[#allocation2 + $0xc0] sm:$0xff]
          %v1430 = vld [vmem:[#allocation2 + $0xc8] sm:$0xff]
          %v1431 = vld [vmem:[#allocation2 + $0xd0] sm:$0xff]
          %v1432 = vld [vmem:[#allocation2 + $0xd8] sm:$0xff]
          %v1433 = vld [vmem:[#allocation2 + $0xe0] sm:$0xff]
          %v1434 = vld [vmem:[#allocation2 + $0xe8] sm:$0xff]
          %v1435 = vld [vmem:[#allocation2 + $0xf0] sm:$0xff]
          %v1436 = vld [vmem:[#allocation2 + $0xf8] sm:$0xff]
          %v1437 = vadd.f32 %v1405, %v1239
          %v1438 = vadd.f32 %v1406, %v1242
          %v1439 = vadd.f32 %v1407, %v1247
          %v1440 = vadd.f32 %v1408, %v1250
          %v1441 = vadd.f32 %v1409, %v1255
          %v1442 = vadd.f32 %v1410, %v1258
          %v1443 = vadd.f32 %v1411, %v1263
          %v1444 = vadd.f32 %v1412, %v1266
          %v1445 = vadd.f32 %v1413, %v1271
          %v1446 = vadd.f32 %v1414, %v1274
          %v1447 = vadd.f32 %v1415, %v1279
          %v1448 = vadd.f32 %v1416, %v1282
          %v1449 = vadd.f32 %v1417, %v1287
          %v1450 = vadd.f32 %v1418, %v1290
          %v1451 = vadd.f32 %v1419, %v1295
          %v1452 = vadd.f32 %v1420, %v1298
          %v1453 = vadd.f32 %v1421, %v1303
          %v1454 = vadd.f32 %v1422, %v1306
          %v1455 = vadd.f32 %v1423, %v1311
          %v1456 = vadd.f32 %v1424, %v1314
          %v1457 = vadd.f32 %v1425, %v1319
          %v1458 = vadd.f32 %v1426, %v1322
          %v1459 = vadd.f32 %v1427, %v1327
          %v1460 = vadd.f32 %v1428, %v1330
          %v1461 = vadd.f32 %v1429, %v1335
          %v1462 = vadd.f32 %v1430, %v1338
          %v1463 = vadd.f32 %v1431, %v1343
          %v1464 = vadd.f32 %v1432, %v1346
          %v1465 = vadd.f32 %v1433, %v1351
          %v1466 = vadd.f32 %v1434, %v1354
          %v1467 = vadd.f32 %v1435, %v1359
          %v1468 = vadd.f32 %v1436, %v1362
          %1469 = vst [vmem:[#allocation2] sm:$0xff] %v1437
          %1470 = vst [vmem:[#allocation2 + $0x8] sm:$0xff] %v1438
          %1471 = vst [vmem:[#allocation2 + $0x10] sm:$0xff] %v1439
          %1472 = vst [vmem:[#allocation2 + $0x18] sm:$0xff] %v1440
          %1473 = vst [vmem:[#allocation2 + $0x20] sm:$0xff] %v1441
          %1474 = vst [vmem:[#allocation2 + $0x28] sm:$0xff] %v1442
          %1475 = vst [vmem:[#allocation2 + $0x30] sm:$0xff] %v1443
          %1476 = vst [vmem:[#allocation2 + $0x38] sm:$0xff] %v1444
          %1477 = vst [vmem:[#allocation2 + $0x40] sm:$0xff] %v1445
          %1478 = vst [vmem:[#allocation2 + $0x48] sm:$0xff] %v1446
          %1479 = vst [vmem:[#allocation2 + $0x50] sm:$0xff] %v1447
          %1480 = vst [vmem:[#allocation2 + $0x58] sm:$0xff] %v1448
          %1481 = vst [vmem:[#allocation2 + $0x60] sm:$0xff] %v1449
          %1482 = vst [vmem:[#allocation2 + $0x68] sm:$0xff] %v1450
          %1483 = vst [vmem:[#allocation2 + $0x70] sm:$0xff] %v1451
          %1484 = vst [vmem:[#allocation2 + $0x78] sm:$0xff] %v1452
          %1485 = vst [vmem:[#allocation2 + $0x80] sm:$0xff] %v1453
          %1486 = vst [vmem:[#allocation2 + $0x88] sm:$0xff] %v1454
          %1487 = vst [vmem:[#allocation2 + $0x90] sm:$0xff] %v1455
          %1488 = vst [vmem:[#allocation2 + $0x98] sm:$0xff] %v1456
          %1489 = vst [vmem:[#allocation2 + $0xa0] sm:$0xff] %v1457
          %1490 = vst [vmem:[#allocation2 + $0xa8] sm:$0xff] %v1458
          %1491 = vst [vmem:[#allocation2 + $0xb0] sm:$0xff] %v1459
          %1492 = vst [vmem:[#allocation2 + $0xb8] sm:$0xff] %v1460
          %1493 = vst [vmem:[#allocation2 + $0xc0] sm:$0xff] %v1461
          %1494 = vst [vmem:[#allocation2 + $0xc8] sm:$0xff] %v1462
          %1495 = vst [vmem:[#allocation2 + $0xd0] sm:$0xff] %v1463
          %1496 = vst [vmem:[#allocation2 + $0xd8] sm:$0xff] %v1464
          %1497 = vst [vmem:[#allocation2 + $0xe0] sm:$0xff] %v1465
          %1498 = vst [vmem:[#allocation2 + $0xe8] sm:$0xff] %v1466
          %1499 = vst [vmem:[#allocation2 + $0xf0] sm:$0xff] %v1467
          %1500 = vst [vmem:[#allocation2 + $0xf8] sm:$0xff] %v1468
        $region72: #{tpu_custom_call.1} parent=43 // pred_fallthru
          _
        // Predicated region
        $region73: #{tpu_custom_call.1} parent=43 // pred_check
          %p1501 = pneg %p1365
        $region74: #{tpu_custom_call.1} parent=43 // pred_check_branch
          %1503 = sbr.rel (%p1501) target = $region76
        $region75: #{tpu_custom_call.1} parent=43 // pred_region
          %v1504 = vld [vmem:[#allocation2] sm:$0xff]
          %v1505 = vld [vmem:[#allocation2 + $0x8] sm:$0xff]
          %v1506 = vld [vmem:[#allocation2 + $0x10] sm:$0xff]
          %v1507 = vld [vmem:[#allocation2 + $0x18] sm:$0xff]
          %v1508 = vld [vmem:[#allocation2 + $0x20] sm:$0xff]
          %v1509 = vld [vmem:[#allocation2 + $0x28] sm:$0xff]
          %v1510 = vld [vmem:[#allocation2 + $0x30] sm:$0xff]
          %v1511 = vld [vmem:[#allocation2 + $0x38] sm:$0xff]
          %v1512 = vld [vmem:[#allocation2 + $0x40] sm:$0xff]
          %v1513 = vld [vmem:[#allocation2 + $0x48] sm:$0xff]
          %v1514 = vld [vmem:[#allocation2 + $0x50] sm:$0xff]
          %v1515 = vld [vmem:[#allocation2 + $0x58] sm:$0xff]
          %v1516 = vld [vmem:[#allocation2 + $0x60] sm:$0xff]
          %v1517 = vld [vmem:[#allocation2 + $0x68] sm:$0xff]
          %v1518 = vld [vmem:[#allocation2 + $0x70] sm:$0xff]
          %v1519 = vld [vmem:[#allocation2 + $0x78] sm:$0xff]
          %v1520 = vld [vmem:[#allocation2 + $0x80] sm:$0xff]
          %v1521 = vld [vmem:[#allocation2 + $0x88] sm:$0xff]
          %v1522 = vld [vmem:[#allocation2 + $0x90] sm:$0xff]
          %v1523 = vld [vmem:[#allocation2 + $0x98] sm:$0xff]
          %v1524 = vld [vmem:[#allocation2 + $0xa0] sm:$0xff]
          %v1525 = vld [vmem:[#allocation2 + $0xa8] sm:$0xff]
          %v1526 = vld [vmem:[#allocation2 + $0xb0] sm:$0xff]
          %v1527 = vld [vmem:[#allocation2 + $0xb8] sm:$0xff]
          %v1528 = vld [vmem:[#allocation2 + $0xc0] sm:$0xff]
          %v1529 = vld [vmem:[#allocation2 + $0xc8] sm:$0xff]
          %v1530 = vld [vmem:[#allocation2 + $0xd0] sm:$0xff]
          %v1531 = vld [vmem:[#allocation2 + $0xd8] sm:$0xff]
          %v1532 = vld [vmem:[#allocation2 + $0xe0] sm:$0xff]
          %v1533 = vld [vmem:[#allocation2 + $0xe8] sm:$0xff]
          %v1534 = vld [vmem:[#allocation2 + $0xf0] sm:$0xff]
          %v1535 = vld [vmem:[#allocation2 + $0xf8] sm:$0xff]
          %v1536 = vpack.c.bf16 %v1505, %v1504
          %v1537 = vpack.c.bf16 %v1507, %v1506
          %v1538 = vpack.c.bf16 %v1509, %v1508
          %v1539 = vpack.c.bf16 %v1511, %v1510
          %v1540 = vpack.c.bf16 %v1513, %v1512
          %v1541 = vpack.c.bf16 %v1515, %v1514
          %v1542 = vpack.c.bf16 %v1517, %v1516
          %v1543 = vpack.c.bf16 %v1519, %v1518
          %v1544 = vpack.c.bf16 %v1521, %v1520
          %v1545 = vpack.c.bf16 %v1523, %v1522
          %v1546 = vpack.c.bf16 %v1525, %v1524
          %v1547 = vpack.c.bf16 %v1527, %v1526
          %v1548 = vpack.c.bf16 %v1529, %v1528
          %v1549 = vpack.c.bf16 %v1531, %v1530
          %v1550 = vpack.c.bf16 %v1533, %v1532
          %v1551 = vpack.c.bf16 %v1535, %v1534
          %v1552 = vld [vmem:[#allocation11] sm:$0xf]
          %v1553 = vld [vmem:[#allocation11 + $0x4] sm:$0xf]
          %v1554 = vld [vmem:[#allocation11 + $0x8] sm:$0xf]
          %v1555 = vld [vmem:[#allocation11 + $0xc] sm:$0xf]
          %v1556 = vld [vmem:[#allocation11 + $0x10] sm:$0xf]
          %v1557 = vld [vmem:[#allocation11 + $0x14] sm:$0xf]
          %v1558 = vld [vmem:[#allocation11 + $0x18] sm:$0xf]
          %v1559 = vld [vmem:[#allocation11 + $0x1c] sm:$0xf]
          %v1560 = vld [vmem:[#allocation11 + $0x20] sm:$0xf]
          %v1561 = vld [vmem:[#allocation11 + $0x24] sm:$0xf]
          %v1562 = vld [vmem:[#allocation11 + $0x28] sm:$0xf]
          %v1563 = vld [vmem:[#allocation11 + $0x2c] sm:$0xf]
          %v1564 = vld [vmem:[#allocation11 + $0x30] sm:$0xf]
          %v1565 = vld [vmem:[#allocation11 + $0x34] sm:$0xf]
          %v1566 = vld [vmem:[#allocation11 + $0x38] sm:$0xf]
          %v1567 = vld [vmem:[#allocation11 + $0x3c] sm:$0xf]
          %v1568 = vld [vmem:[%s5] sm:$0x1]
          %v1570 = vlaneseq
          %v1571 = vshrl.u32 %v1570, 7
          %v1572 = vsub.s32 0, %v1571
          %v1573 = vrot.slane %v1568, %v1572
          %v1591 = vunpack.c.l.b16 %v1552
          %v1592 = vunpack.c.l.b16 %v1553
          %v1593 = vunpack.c.l.b16 %v1554
          %v1594 = vunpack.c.l.b16 %v1555
          %v1595 = vunpack.c.l.b16 %v1556
          %v1596 = vunpack.c.l.b16 %v1557
          %v1597 = vunpack.c.l.b16 %v1558
          %v1598 = vunpack.c.l.b16 %v1559
          %v1599 = vunpack.c.l.b16 %v1560
          %v1600 = vunpack.c.l.b16 %v1561
          %v1601 = vunpack.c.l.b16 %v1562
          %v1602 = vunpack.c.l.b16 %v1563
          %v1603 = vunpack.c.l.b16 %v1564
          %v1604 = vunpack.c.l.b16 %v1565
          %v1605 = vunpack.c.l.b16 %v1566
          %v1606 = vunpack.c.l.b16 %v1567
          %v1607 = vpack.c.b16 %v1592, %v1591
          %v1608 = vpack.c.b16 %v1594, %v1593
          %v1609 = vpack.c.b16 %v1596, %v1595
          %v1610 = vpack.c.b16 %v1598, %v1597
          %v1611 = vpack.c.b16 %v1600, %v1599
          %v1612 = vpack.c.b16 %v1602, %v1601
          %v1613 = vpack.c.b16 %v1604, %v1603
          %v1614 = vpack.c.b16 %v1606, %v1605
          %1623 = vmatprep.subr.bf16.mxu0 0
          %1624 = vmatpush1.bf16.msra.mxu0 %v1607
          %1625 = vmatprep.subr.bf16.mxu0 0
          %1626 = vmatpush1.bf16.msra.mxu0 %v1608
          %1627 = vmatprep.subr.bf16.mxu0 0
          %1628 = vmatpush1.bf16.msra.mxu0 %v1609
          %1629 = vmatprep.subr.bf16.mxu0 0
          %1630 = vmatpush1.bf16.msra.mxu0 %v1610
          %1631 = vmatprep.subr.bf16.mxu0 0
          %1632 = vmatpush1.bf16.msra.mxu0 %v1611
          %1633 = vmatprep.subr.bf16.mxu0 0
          %1634 = vmatpush1.bf16.msra.mxu0 %v1612
          %1635 = vmatprep.subr.bf16.mxu0 0
          %1636 = vmatpush1.bf16.msra.mxu0 %v1613
          %1637 = vmatprep.subr.bf16.mxu0 0
          %1638 = vmatpush1.bf16.msra.mxu0 %v1614
          %1639 = vmatprep.subr.bf16.mxu0 0
          %1640 = vmatpush1.bf16.msra.mxu0 0
          %1641 = vmatprep.subr.bf16.mxu0 0
          %1642 = vmatpush1.bf16.msra.mxu0 0
          %1643 = vmatprep.subr.bf16.mxu0 0
          %1644 = vmatpush1.bf16.msra.mxu0 0
          %1645 = vmatprep.subr.bf16.mxu0 0
          %1646 = vmatpush1.bf16.msra.mxu0 0
          %1647 = vmatprep.subr.bf16.mxu0 0
          %1648 = vmatpush1.bf16.msra.mxu0 0
          %1649 = vmatprep.subr.bf16.mxu0 0
          %1650 = vmatpush1.bf16.msra.mxu0 0
          %1651 = vmatprep.subr.bf16.mxu0 0
          %1652 = vmatpush1.bf16.msra.mxu0 0
          %1653 = vmatprep.subr.bf16.mxu0 0
          %1654 = vmatpush1.bf16.msra.mxu0 0
          %1655 = vmatprep.mubr.bf16.mxu0 0
          %1656 = vmatmul.mubr.bf16.gmra.mrb[0].mxu0 %v1536
          %v1657 = vpop.f32.mrb[0].mxu0
          %v1658 = vadd.f32 %v1573, %v1657
          %v1659 = vpop.f32.mrb[0].mxu0
          %v1660 = vpop.f32.mrb[0].mxu0
          %v1661 = vadd.f32 %v1573, %v1660
          %v1662 = vpop.f32.mrb[0].mxu0
          %1663 = vmatprep.mubr.bf16.mxu0 0
          %1664 = vmatmul.mubr.bf16.gmra.mrb[0].mxu0 %v1537
          %v1665 = vpop.f32.mrb[0].mxu0
          %v1666 = vadd.f32 %v1573, %v1665
          %v1667 = vpop.f32.mrb[0].mxu0
          %v1668 = vpop.f32.mrb[0].mxu0
          %v1669 = vadd.f32 %v1573, %v1668
          %v1670 = vpop.f32.mrb[0].mxu0
          %1671 = vmatprep.mubr.bf16.mxu0 0
          %1672 = vmatmul.mubr.bf16.gmra.mrb[0].mxu0 %v1538
          %v1673 = vpop.f32.mrb[0].mxu0
          %v1674 = vadd.f32 %v1573, %v1673
          %v1675 = vpop.f32.mrb[0].mxu0
          %v1676 = vpop.f32.mrb[0].mxu0
          %v1677 = vadd.f32 %v1573, %v1676
          %v1678 = vpop.f32.mrb[0].mxu0
          %1679 = vmatprep.mubr.bf16.mxu0 0
          %1680 = vmatmul.mubr.bf16.gmra.mrb[0].mxu0 %v1539
          %v1681 = vpop.f32.mrb[0].mxu0
          %v1682 = vadd.f32 %v1573, %v1681
          %v1683 = vpop.f32.mrb[0].mxu0
          %v1684 = vpop.f32.mrb[0].mxu0
          %v1685 = vadd.f32 %v1573, %v1684
          %v1686 = vpop.f32.mrb[0].mxu0
          %1687 = vmatprep.mubr.bf16.mxu0 0
          %1688 = vmatmul.mubr.bf16.gmra.mrb[0].mxu0 %v1540
          %v1689 = vpop.f32.mrb[0].mxu0
          %v1690 = vadd.f32 %v1573, %v1689
          %v1691 = vpop.f32.mrb[0].mxu0
          %v1692 = vpop.f32.mrb[0].mxu0
          %v1693 = vadd.f32 %v1573, %v1692
          %v1694 = vpop.f32.mrb[0].mxu0
          %1695 = vmatprep.mubr.bf16.mxu0 0
          %1696 = vmatmul.mubr.bf16.gmra.mrb[0].mxu0 %v1541
          %v1697 = vpop.f32.mrb[0].mxu0
          %v1698 = vadd.f32 %v1573, %v1697
          %v1699 = vpop.f32.mrb[0].mxu0
          %v1700 = vpop.f32.mrb[0].mxu0
          %v1701 = vadd.f32 %v1573, %v1700
          %v1702 = vpop.f32.mrb[0].mxu0
          %1703 = vmatprep.mubr.bf16.mxu0 0
          %1704 = vmatmul.mubr.bf16.gmra.mrb[0].mxu0 %v1542
          %v1705 = vpop.f32.mrb[0].mxu0
          %v1706 = vadd.f32 %v1573, %v1705
          %v1707 = vpop.f32.mrb[0].mxu0
          %v1708 = vpop.f32.mrb[0].mxu0
          %v1709 = vadd.f32 %v1573, %v1708
          %v1710 = vpop.f32.mrb[0].mxu0
          %1711 = vmatprep.mubr.bf16.mxu0 0
          %1712 = vmatmul.mubr.bf16.gmra.mrb[0].mxu0 %v1543
          %v1713 = vpop.f32.mrb[0].mxu0
          %v1714 = vadd.f32 %v1573, %v1713
          %v1715 = vpop.f32.mrb[0].mxu0
          %v1716 = vpop.f32.mrb[0].mxu0
          %v1717 = vadd.f32 %v1573, %v1716
          %v1718 = vpop.f32.mrb[0].mxu0
          %1719 = vmatprep.mubr.bf16.mxu0 0
          %1720 = vmatmul.mubr.bf16.gmra.mrb[0].mxu0 %v1544
          %v1721 = vpop.f32.mrb[0].mxu0
          %v1722 = vadd.f32 %v1573, %v1721
          %v1723 = vpop.f32.mrb[0].mxu0
          %v1724 = vpop.f32.mrb[0].mxu0
          %v1725 = vadd.f32 %v1573, %v1724
          %v1726 = vpop.f32.mrb[0].mxu0
          %1727 = vmatprep.mubr.bf16.mxu0 0
          %1728 = vmatmul.mubr.bf16.gmra.mrb[0].mxu0 %v1545
          %v1729 = vpop.f32.mrb[0].mxu0
          %v1730 = vadd.f32 %v1573, %v1729
          %v1731 = vpop.f32.mrb[0].mxu0
          %v1732 = vpop.f32.mrb[0].mxu0
          %v1733 = vadd.f32 %v1573, %v1732
          %v1734 = vpop.f32.mrb[0].mxu0
          %1735 = vmatprep.mubr.bf16.mxu0 0
          %1736 = vmatmul.mubr.bf16.gmra.mrb[0].mxu0 %v1546
          %v1737 = vpop.f32.mrb[0].mxu0
          %v1738 = vadd.f32 %v1573, %v1737
          %v1739 = vpop.f32.mrb[0].mxu0
          %v1740 = vpop.f32.mrb[0].mxu0
          %v1741 = vadd.f32 %v1573, %v1740
          %v1742 = vpop.f32.mrb[0].mxu0
          %1743 = vmatprep.mubr.bf16.mxu0 0
          %1744 = vmatmul.mubr.bf16.gmra.mrb[0].mxu0 %v1547
          %v1745 = vpop.f32.mrb[0].mxu0
          %v1746 = vadd.f32 %v1573, %v1745
          %v1747 = vpop.f32.mrb[0].mxu0
          %v1748 = vpop.f32.mrb[0].mxu0
          %v1749 = vadd.f32 %v1573, %v1748
          %v1750 = vpop.f32.mrb[0].mxu0
          %1751 = vmatprep.mubr.bf16.mxu0 0
          %1752 = vmatmul.mubr.bf16.gmra.mrb[0].mxu0 %v1548
          %v1753 = vpop.f32.mrb[0].mxu0
          %v1754 = vadd.f32 %v1573, %v1753
          %v1755 = vpop.f32.mrb[0].mxu0
          %v1756 = vpop.f32.mrb[0].mxu0
          %v1757 = vadd.f32 %v1573, %v1756
          %v1758 = vpop.f32.mrb[0].mxu0
          %1759 = vmatprep.mubr.bf16.mxu0 0
          %1760 = vmatmul.mubr.bf16.gmra.mrb[0].mxu0 %v1549
          %v1761 = vpop.f32.mrb[0].mxu0
          %v1762 = vadd.f32 %v1573, %v1761
          %v1763 = vpop.f32.mrb[0].mxu0
          %v1764 = vpop.f32.mrb[0].mxu0
          %v1765 = vadd.f32 %v1573, %v1764
          %v1766 = vpop.f32.mrb[0].mxu0
          %1767 = vmatprep.mubr.bf16.mxu0 0
          %1768 = vmatmul.mubr.bf16.gmra.mrb[0].mxu0 %v1550
          %v1769 = vpop.f32.mrb[0].mxu0
          %v1770 = vadd.f32 %v1573, %v1769
          %v1771 = vpop.f32.mrb[0].mxu0
          %v1772 = vpop.f32.mrb[0].mxu0
          %v1773 = vadd.f32 %v1573, %v1772
          %v1774 = vpop.f32.mrb[0].mxu0
          %1775 = vmatprep.mubr.bf16.mxu0 0
          %1776 = vmatmul.mubr.bf16.gmra.mrb[0].mxu0 %v1551
          %v1777 = vpop.f32.mrb[0].mxu0
          %v1778 = vadd.f32 %v1573, %v1777
          %v1779 = vpop.f32.mrb[0].mxu0
          %v1780 = vpop.f32.mrb[0].mxu0
          %v1781 = vadd.f32 %v1573, %v1780
          %v1782 = vpop.f32.mrb[0].mxu0
          %1783 = vdwg.mxu0
          %s1784 = smul.u32 %s29, 256
          %s1785 = sshra.s32 %s1784, 4
          %s1786 = sand.u32 %s1784, 15
          %s1787 = smul.addr %s1785, 8
          %s1788 = scalar_lea.vmem [#allocation3], %s1787
          %v1789 = vld [vmem:[%s1788] sm:$0xff]
          %v1790 = vld [vmem:[%s1788 + $0x8] sm:$0xff]
          %v1791 = vld [vmem:[%s1788 + $0x10] sm:$0xff]
          %v1792 = vld [vmem:[%s1788 + $0x18] sm:$0xff]
          %v1793 = vld [vmem:[%s1788 + $0x20] sm:$0xff]
          %v1794 = vld [vmem:[%s1788 + $0x28] sm:$0xff]
          %v1795 = vld [vmem:[%s1788 + $0x30] sm:$0xff]
          %v1796 = vld [vmem:[%s1788 + $0x38] sm:$0xff]
          %v1797 = vld [vmem:[%s1788 + $0x40] sm:$0xff]
          %v1798 = vld [vmem:[%s1788 + $0x48] sm:$0xff]
          %v1799 = vld [vmem:[%s1788 + $0x50] sm:$0xff]
          %v1800 = vld [vmem:[%s1788 + $0x58] sm:$0xff]
          %v1801 = vld [vmem:[%s1788 + $0x60] sm:$0xff]
          %v1802 = vld [vmem:[%s1788 + $0x68] sm:$0xff]
          %v1803 = vld [vmem:[%s1788 + $0x70] sm:$0xff]
          %v1804 = vld [vmem:[%s1788 + $0x78] sm:$0xff]
          %v1805 = vunpack.c.l.bf16 %v1789
          %v1806 = vunpack.c.h.bf16 %v1789
          %v1807 = vunpack.c.l.bf16 %v1790
          %v1808 = vunpack.c.h.bf16 %v1790
          %v1809 = vunpack.c.l.bf16 %v1791
          %v1810 = vunpack.c.h.bf16 %v1791
          %v1811 = vunpack.c.l.bf16 %v1792
          %v1812 = vunpack.c.h.bf16 %v1792
          %v1813 = vunpack.c.l.bf16 %v1793
          %v1814 = vunpack.c.h.bf16 %v1793
          %v1815 = vunpack.c.l.bf16 %v1794
          %v1816 = vunpack.c.h.bf16 %v1794
          %v1817 = vunpack.c.l.bf16 %v1795
          %v1818 = vunpack.c.h.bf16 %v1795
          %v1819 = vunpack.c.l.bf16 %v1796
          %v1820 = vunpack.c.h.bf16 %v1796
          %v1821 = vunpack.c.l.bf16 %v1797
          %v1822 = vunpack.c.h.bf16 %v1797
          %v1823 = vunpack.c.l.bf16 %v1798
          %v1824 = vunpack.c.h.bf16 %v1798
          %v1825 = vunpack.c.l.bf16 %v1799
          %v1826 = vunpack.c.h.bf16 %v1799
          %v1827 = vunpack.c.l.bf16 %v1800
          %v1828 = vunpack.c.h.bf16 %v1800
          %v1829 = vunpack.c.l.bf16 %v1801
          %v1830 = vunpack.c.h.bf16 %v1801
          %v1831 = vunpack.c.l.bf16 %v1802
          %v1832 = vunpack.c.h.bf16 %v1802
          %v1833 = vunpack.c.l.bf16 %v1803
          %v1834 = vunpack.c.h.bf16 %v1803
          %v1835 = vunpack.c.l.bf16 %v1804
          %v1836 = vunpack.c.h.bf16 %v1804
          %v1837 = vmul.f32 %v1805, %v1658
          %v1838 = vmul.f32 %v1806, %v1661
          %v1839 = vmul.f32 %v1807, %v1666
          %v1840 = vmul.f32 %v1808, %v1669
          %v1841 = vmul.f32 %v1809, %v1674
          %v1842 = vmul.f32 %v1810, %v1677
          %v1843 = vmul.f32 %v1811, %v1682
          %v1844 = vmul.f32 %v1812, %v1685
          %v1845 = vmul.f32 %v1813, %v1690
          %v1846 = vmul.f32 %v1814, %v1693
          %v1847 = vmul.f32 %v1815, %v1698
          %v1848 = vmul.f32 %v1816, %v1701
          %v1849 = vmul.f32 %v1817, %v1706
          %v1850 = vmul.f32 %v1818, %v1709
          %v1851 = vmul.f32 %v1819, %v1714
          %v1852 = vmul.f32 %v1820, %v1717
          %v1853 = vmul.f32 %v1821, %v1722
          %v1854 = vmul.f32 %v1822, %v1725
          %v1855 = vmul.f32 %v1823, %v1730
          %v1856 = vmul.f32 %v1824, %v1733
          %v1857 = vmul.f32 %v1825, %v1738
          %v1858 = vmul.f32 %v1826, %v1741
          %v1859 = vmul.f32 %v1827, %v1746
          %v1860 = vmul.f32 %v1828, %v1749
          %v1861 = vmul.f32 %v1829, %v1754
          %v1862 = vmul.f32 %v1830, %v1757
          %v1863 = vmul.f32 %v1831, %v1762
          %v1864 = vmul.f32 %v1832, %v1765
          %v1865 = vmul.f32 %v1833, %v1770
          %v1866 = vmul.f32 %v1834, %v1773
          %v1867 = vmul.f32 %v1835, %v1778
          %v1868 = vmul.f32 %v1836, %v1781
          %p1869 = scmp.eq.s32.totalorder %s28, 1
          %v1870 = vmul.f32 %v1805, %v1837
          %v1871 = vmul.f32 %v1806, %v1838
          %v1872 = vmul.f32 %v1807, %v1839
          %v1873 = vmul.f32 %v1808, %v1840
          %v1874 = vmul.f32 %v1809, %v1841
          %v1875 = vmul.f32 %v1810, %v1842
          %v1876 = vmul.f32 %v1811, %v1843
          %v1877 = vmul.f32 %v1812, %v1844
          %v1878 = vmul.f32 %v1813, %v1845
          %v1879 = vmul.f32 %v1814, %v1846
          %v1880 = vmul.f32 %v1815, %v1847
          %v1881 = vmul.f32 %v1816, %v1848
          %v1882 = vmul.f32 %v1817, %v1849
          %v1883 = vmul.f32 %v1818, %v1850
          %v1884 = vmul.f32 %v1819, %v1851
          %v1885 = vmul.f32 %v1820, %v1852
          %v1886 = vmul.f32 %v1821, %v1853
          %v1887 = vmul.f32 %v1822, %v1854
          %v1888 = vmul.f32 %v1823, %v1855
          %v1889 = vmul.f32 %v1824, %v1856
          %v1890 = vmul.f32 %v1825, %v1857
          %v1891 = vmul.f32 %v1826, %v1858
          %v1892 = vmul.f32 %v1827, %v1859
          %v1893 = vmul.f32 %v1828, %v1860
          %v1894 = vmul.f32 %v1829, %v1861
          %v1895 = vmul.f32 %v1830, %v1862
          %v1896 = vmul.f32 %v1831, %v1863
          %v1897 = vmul.f32 %v1832, %v1864
          %v1898 = vmul.f32 %v1833, %v1865
          %v1899 = vmul.f32 %v1834, %v1866
          %v1900 = vmul.f32 %v1835, %v1867
          %v1901 = vmul.f32 %v1836, %v1868
          %s1902 = scalar_select %p1869, 1, 0
          %v1903 = vstv %s1902
          %vm1904 = vcmp.eq.s32.totalorder %v1903, 1
          %v1905 = vsel %vm1904, %v1837, %v1870
          %v1906 = vsel %vm1904, %v1838, %v1871
          %v1907 = vsel %vm1904, %v1839, %v1872
          %v1908 = vsel %vm1904, %v1840, %v1873
          %v1909 = vsel %vm1904, %v1841, %v1874
          %v1910 = vsel %vm1904, %v1842, %v1875
          %v1911 = vsel %vm1904, %v1843, %v1876
          %v1912 = vsel %vm1904, %v1844, %v1877
          %v1913 = vsel %vm1904, %v1845, %v1878
          %v1914 = vsel %vm1904, %v1846, %v1879
          %v1915 = vsel %vm1904, %v1847, %v1880
          %v1916 = vsel %vm1904, %v1848, %v1881
          %v1917 = vsel %vm1904, %v1849, %v1882
          %v1918 = vsel %vm1904, %v1850, %v1883
          %v1919 = vsel %vm1904, %v1851, %v1884
          %v1920 = vsel %vm1904, %v1852, %v1885
          %v1921 = vsel %vm1904, %v1853, %v1886
          %v1922 = vsel %vm1904, %v1854, %v1887
          %v1923 = vsel %vm1904, %v1855, %v1888
          %v1924 = vsel %vm1904, %v1856, %v1889
          %v1925 = vsel %vm1904, %v1857, %v1890
          %v1926 = vsel %vm1904, %v1858, %v1891
          %v1927 = vsel %vm1904, %v1859, %v1892
          %v1928 = vsel %vm1904, %v1860, %v1893
          %v1929 = vsel %vm1904, %v1861, %v1894
          %v1930 = vsel %vm1904, %v1862, %v1895
          %v1931 = vsel %vm1904, %v1863, %v1896
          %v1932 = vsel %vm1904, %v1864, %v1897
          %v1933 = vsel %vm1904, %v1865, %v1898
          %v1934 = vsel %vm1904, %v1866, %v1899
          %v1935 = vsel %vm1904, %v1867, %v1900
          %v1936 = vsel %vm1904, %v1868, %v1901
          %s1937 = ssub.s32 1, %s988
          %s1938 = smul.u32 %s1937, 256
          %s1939 = sadd.s32 %s1938, %s1784
          %v1940 = vpack.c.bf16 %v1906, %v1905
          %v1941 = vpack.c.bf16 %v1908, %v1907
          %v1942 = vpack.c.bf16 %v1910, %v1909
          %v1943 = vpack.c.bf16 %v1912, %v1911
          %v1944 = vpack.c.bf16 %v1914, %v1913
          %v1945 = vpack.c.bf16 %v1916, %v1915
          %v1946 = vpack.c.bf16 %v1918, %v1917
          %v1947 = vpack.c.bf16 %v1920, %v1919
          %v1948 = vpack.c.bf16 %v1922, %v1921
          %v1949 = vpack.c.bf16 %v1924, %v1923
          %v1950 = vpack.c.bf16 %v1926, %v1925
          %v1951 = vpack.c.bf16 %v1928, %v1927
          %v1952 = vpack.c.bf16 %v1930, %v1929
          %v1953 = vpack.c.bf16 %v1932, %v1931
          %v1954 = vpack.c.bf16 %v1934, %v1933
          %v1955 = vpack.c.bf16 %v1936, %v1935
          %s1956 = sshra.s32 %s1939, 4
          %s1957 = sand.u32 %s1939, 15
          %s1958 = smul.addr %s1956, 8
          %s1959 = scalar_lea.vmem [#allocation4], %s1958
          %1960 = vst [vmem:[%s1959] sm:$0xff] %v1940
          %1961 = vst [vmem:[%s1959 + $0x8] sm:$0xff] %v1941
          %1962 = vst [vmem:[%s1959 + $0x10] sm:$0xff] %v1942
          %1963 = vst [vmem:[%s1959 + $0x18] sm:$0xff] %v1943
          %1964 = vst [vmem:[%s1959 + $0x20] sm:$0xff] %v1944
          %1965 = vst [vmem:[%s1959 + $0x28] sm:$0xff] %v1945
          %1966 = vst [vmem:[%s1959 + $0x30] sm:$0xff] %v1946
          %1967 = vst [vmem:[%s1959 + $0x38] sm:$0xff] %v1947
          %1968 = vst [vmem:[%s1959 + $0x40] sm:$0xff] %v1948
          %1969 = vst [vmem:[%s1959 + $0x48] sm:$0xff] %v1949
          %1970 = vst [vmem:[%s1959 + $0x50] sm:$0xff] %v1950
          %1971 = vst [vmem:[%s1959 + $0x58] sm:$0xff] %v1951
          %1972 = vst [vmem:[%s1959 + $0x60] sm:$0xff] %v1952
          %1973 = vst [vmem:[%s1959 + $0x68] sm:$0xff] %v1953
          %1974 = vst [vmem:[%s1959 + $0x70] sm:$0xff] %v1954
          %1975 = vst [vmem:[%s1959 + $0x78] sm:$0xff] %v1955
          %1976 = vst [vmem:[#allocation13] sm:$0xff] %v1905
          %1977 = vst [vmem:[#allocation13 + $0x8] sm:$0xff] %v1906
          %1978 = vst [vmem:[#allocation13 + $0x10] sm:$0xff] %v1907
          %1979 = vst [vmem:[#allocation13 + $0x18] sm:$0xff] %v1908
          %1980 = vst [vmem:[#allocation13 + $0x20] sm:$0xff] %v1909
          %1981 = vst [vmem:[#allocation13 + $0x28] sm:$0xff] %v1910
          %1982 = vst [vmem:[#allocation13 + $0x30] sm:$0xff] %v1911
          %1983 = vst [vmem:[#allocation13 + $0x38] sm:$0xff] %v1912
          %1984 = vst [vmem:[#allocation13 + $0x40] sm:$0xff] %v1913
          %1985 = vst [vmem:[#allocation13 + $0x48] sm:$0xff] %v1914
          %1986 = vst [vmem:[#allocation13 + $0x50] sm:$0xff] %v1915
          %1987 = vst [vmem:[#allocation13 + $0x58] sm:$0xff] %v1916
          %1988 = vst [vmem:[#allocation13 + $0x60] sm:$0xff] %v1917
          %1989 = vst [vmem:[#allocation13 + $0x68] sm:$0xff] %v1918
          %1990 = vst [vmem:[#allocation13 + $0x70] sm:$0xff] %v1919
          %1991 = vst [vmem:[#allocation13 + $0x78] sm:$0xff] %v1920
          %1992 = vst [vmem:[#allocation13 + $0x80] sm:$0xff] %v1921
          %1993 = vst [vmem:[#allocation13 + $0x88] sm:$0xff] %v1922
          %1994 = vst [vmem:[#allocation13 + $0x90] sm:$0xff] %v1923
          %1995 = vst [vmem:[#allocation13 + $0x98] sm:$0xff] %v1924
          %1996 = vst [vmem:[#allocation13 + $0xa0] sm:$0xff] %v1925
          %1997 = vst [vmem:[#allocation13 + $0xa8] sm:$0xff] %v1926
          %1998 = vst [vmem:[#allocation13 + $0xb0] sm:$0xff] %v1927
          %1999 = vst [vmem:[#allocation13 + $0xb8] sm:$0xff] %v1928
          %2000 = vst [vmem:[#allocation13 + $0xc0] sm:$0xff] %v1929
          %2001 = vst [vmem:[#allocation13 + $0xc8] sm:$0xff] %v1930
          %2002 = vst [vmem:[#allocation13 + $0xd0] sm:$0xff] %v1931
          %2003 = vst [vmem:[#allocation13 + $0xd8] sm:$0xff] %v1932
          %2004 = vst [vmem:[#allocation13 + $0xe0] sm:$0xff] %v1933
          %2005 = vst [vmem:[#allocation13 + $0xe8] sm:$0xff] %v1934
          %2006 = vst [vmem:[#allocation13 + $0xf0] sm:$0xff] %v1935
          %2007 = vst [vmem:[#allocation13 + $0xf8] sm:$0xff] %v1936
        $region76: #{tpu_custom_call.1} parent=43 // pred_fallthru
          _
        // Predicated region
        $region77: #{tpu_custom_call.1} parent=43 // pred_check
          %p2008 = pneg %p208
        $region78: #{tpu_custom_call.1} parent=43 // pred_check_branch
          %2010 = sbr.rel (%p2008) target = $region80
        $region79: #{tpu_custom_call.1} parent=43 // pred_region
          %s2011 = smul.u32 32, %s29
          %s2013 = ssub.s32 4096, 4096
          %2014 = vsyncadd [#allocation7], %s2013
          %s2015 = smul.addr %s2011, 128
          %s2016 = scalar_lea.hbm %s6, %s2015
          %s2017 = sshll.u32 [#allocation13], 4
          %s2018 = int_to_ptr.vmem [resolvable:$true] %s2017
          %2023 = dma.vmem_to_hbm [thread:$0]  %s2018, 4096, %s2016, [#allocation7], 128, 128, 8
        $region80: #{tpu_custom_call.1} parent=43 // pred_fallthru
          _
        // Predicated region
        $region81: #{tpu_custom_call.1} parent=43 // pred_check
          %p2024 = pneg %p208
        $region82: #{tpu_custom_call.1} parent=43 // pred_check_branch
          %2026 = sbr.rel (%p2024) target = $region84
        $region83: #{tpu_custom_call.1} parent=43 // pred_region
          %2027 = dma.done [#allocation7], 4096
        $region84: #{tpu_custom_call.1} parent=43 // pred_fallthru
          _
      $region44: #{tpu_custom_call.1} parent=5 // pred_fallthru
        _
      %p2028 = scmp.le.s32.totalorder 2, %s18
      // Predicated region
      $region85: #{tpu_custom_call.1} parent=5 // pred_check
        %p2029 = pneg %p2028
      $region86: #{tpu_custom_call.1} parent=5 // pred_check_branch
        %2031 = sbr.rel (%p2029) target = $region88
      $region87: #{tpu_custom_call.1} parent=5 // pred_region
        %s2032 = ssub.s32 %s18, 2
      $region88: #{tpu_custom_call.1} parent=5 // pred_fallthru
        _
    $region6: #{tpu_custom_call.1} parent=1 // loop_footer
      %s22 = sadd.s32 1, %s18
    $region7: #{tpu_custom_call.1} parent=1 // loop_footer_branch
      %17 = sbr.rel target = $region3
    $region8: #{tpu_custom_call.1} parent=1 // loop_exit
      _
    %2033 = vsyncpa [#allocation6], 1
    %s2034 = scalar_lea.sflag [#allocation6], 1
    %2035 = vsyncpa %s2034, 1
    %2036 = vsyncpa [#allocation9], 1
    %2037 = vsyncpa [#allocation12], 1
    %2038 = vsyncpa [#allocation7], 1
    %s2039 = scalar_lea.sflag [#allocation7], 1
    %2040 = vsyncpa %s2039, 1

</llo_original>
